<compile_context>
chip_gen: v5e
topology: v5e:2x2
jax: 0.10.0
libtpu: 0.0.40
codegen_flags: <defaults>
</compile_context>

<pallas_src>
import functools

import jax
import jax.numpy as jnp
from jax.experimental import pallas as pl
from jax.experimental.pallas import tpu as pltpu

LANE = 128      # TPU lane width


# ----------------------------- Pallas kernel --------------------------------

def _vae_fused_kernel(x_ref, eps_ref,
                      enc_w1_ref, enc_b1_ref, enc_wh_ref, enc_bh_ref,
                      dec_w1_ref, dec_b1_ref, dec_w2_ref, dec_b2_ref,
                      loc_ref, stats_ref, *, latent_dim):
    L = latent_dim

    # ---- encoder hidden layer (bf16 cast in-kernel, f32 MXU accumulate) -----
    x = x_ref[...].astype(jnp.bfloat16)
    h1 = jnp.dot(x, enc_w1_ref[...], preferred_element_type=jnp.float32)
    h1 = jnp.maximum(h1 + enc_b1_ref[...], 0.0)

    # ---- fused (mu | logvar) head: one (HID, 128) matmul ---------------------
    head = jnp.dot(h1.astype(jnp.bfloat16), enc_wh_ref[...],
                   preferred_element_type=jnp.float32) + enc_bh_ref[...]
    mu = head[:, 0:L]
    lv = head[:, L:2 * L]
    scale = jnp.logaddexp(lv, 0.0) + 1e-6          # softplus, f32 epilogue

    # ---- qz_x.rsample([1]).squeeze()  (reparameterization, K=1) -------------
    z = mu + scale * eps_ref[...]

    # ---- lane-dense stats tile [mu | scale | z | 0-pad]; assembled with
    #      direct sliced (masked) stores, no concatenate / XLU shuffles --------
    stats_ref[...] = jnp.zeros_like(stats_ref)
    stats_ref[:, 0:L] = mu
    stats_ref[:, L:2 * L] = scale
    stats_ref[:, 2 * L:3 * L] = z

    # ---- decoder, fed from the 128-lane stats tile.  dec_w1 is zero-padded to
    #      (128, HID) with its live rows at lanes [2L:3L), so mu/scale lanes
    #      contribute nothing and z never needs a separate narrow slice --------
    zin = stats_ref[...].astype(jnp.bfloat16)      # (tm, 128)
    h2 = jnp.dot(zin, dec_w1_ref[...], preferred_element_type=jnp.float32)
    h2 = jnp.maximum(h2 + dec_b1_ref[...], 0.0)
    logits = jnp.dot(h2.astype(jnp.bfloat16), dec_w2_ref[...],
                     preferred_element_type=jnp.float32) + dec_b2_ref[...]
    loc_ref[...] = jax.nn.sigmoid(logits).astype(loc_ref.dtype)


# --------------------------- parameter packing --------------------------------

def pack_vae_params(*, enc_w1, enc_b1, w_mu, b_mu, w_lv, b_lv,
                    dec_w1, dec_b1, dec_w2, dec_b2, latent_dim):
    """One-time packing of natural-shaped weights into the fused / lane-padded
    layout the kernel expects (done once, outside the forward path)."""
    L = latent_dim
    assert 3 * L <= LANE, "fused head / stats packing requires 3*latent_dim <= 128"
    HID = enc_w1.shape[1]
    D_out = dec_w2.shape[1]

    enc_wh = (jnp.zeros((HID, LANE), jnp.float32)
              .at[:, 0:L].set(w_mu.astype(jnp.float32))
              .at[:, L:2 * L].set(w_lv.astype(jnp.float32))).astype(jnp.bfloat16)
    enc_bh = (jnp.zeros((1, LANE), jnp.float32)
              .at[:, 0:L].set(b_mu.reshape(1, L).astype(jnp.float32))
              .at[:, L:2 * L].set(b_lv.reshape(1, L).astype(jnp.float32)))
    dec_w1p = (jnp.zeros((LANE, HID), jnp.float32)
               .at[2 * L:3 * L, :].set(dec_w1.astype(jnp.float32))
               ).astype(jnp.bfloat16)

    return {
        'enc_w1': enc_w1.astype(jnp.bfloat16),
        'enc_b1': enc_b1.reshape(1, HID).astype(jnp.float32),
        'enc_wh': enc_wh,
        'enc_bh': enc_bh,
        'dec_w1': dec_w1p,
        'dec_b1': dec_b1.reshape(1, HID).astype(jnp.float32),
        'dec_w2': dec_w2.astype(jnp.bfloat16),
        'dec_b2': dec_b2.reshape(1, D_out).astype(jnp.float32),
    }


# ------------------------------ wrapper ---------------------------------------

def _pick_tm(m):
    # Largest batch tile (multiple of 8, <=256) that divides M; otherwise use a
    # single full-extent block (exempt from the (8,128) divisibility rule).
    for tm in (256, 128, 64, 32, 16, 8):
        if m % tm == 0:
            return tm
    return m


def vae_forward(x, params, eps, *, latent_dim, likelihood_scale=0.75):
    """Mirrors VAE.forward(x, K=1):
         qz_x_params = enc(x); zs = qz_x.rsample([1]).squeeze(); px_z = dec(zs)
       Returns ((mu, scale), (loc, px_scale), zs)."""
    B = x.shape[0]
    x_flat = x.reshape(B, -1)              # torch-style .view(B, -1); no pad, no cast
    D_in = x_flat.shape[1]
    L = latent_dim
    assert 3 * L <= LANE, "stats packing requires 3*latent_dim <= 128"

    HID = params['enc_w1'].shape[1]
    tm = _pick_tm(B)
    grid = (B // tm,)

    row = lambda i: (i, 0)     # batch-tiled arrays
    const = lambda i: (0, 0)   # grid-invariant weights (stay VMEM-resident)

    in_arrays = (x_flat, eps,
                 params['enc_w1'], params['enc_b1'],
                 params['enc_wh'], params['enc_bh'],
                 params['dec_w1'], params['dec_b1'],
                 params['dec_w2'], params['dec_b2'])

    in_specs = [
        pl.BlockSpec((tm, D_in), row),                       # x_flat
        pl.BlockSpec((tm, L), row),                          # eps
        pl.BlockSpec(params['enc_w1'].shape, const),
        pl.BlockSpec(params['enc_b1'].shape, const),
        pl.BlockSpec(params['enc_wh'].shape, const),
        pl.BlockSpec(params['enc_bh'].shape, const),
        pl.BlockSpec(params['dec_w1'].shape, const),
        pl.BlockSpec(params['dec_b1'].shape, const),
        pl.BlockSpec(params['dec_w2'].shape, const),
        pl.BlockSpec(params['dec_b2'].shape, const),
    ]
    out_specs = (pl.BlockSpec((tm, D_in), row),
                 pl.BlockSpec((tm, LANE), row))

    flops = 2 * B * (D_in * HID + HID * LANE + LANE * HID + HID * D_in)
    transcendentals = B * (D_in + 2 * L)          # sigmoid + softplus exp/log
    bytes_accessed = (sum(int(a.size) * a.dtype.itemsize for a in in_arrays)
                      + B * D_in * 4 + B * LANE * 4)

    loc, stats = pl.pallas_call(
        functools.partial(_vae_fused_kernel, latent_dim=L),
        grid=grid,
        in_specs=in_specs,
        out_specs=out_specs,
        out_shape=(jax.ShapeDtypeStruct((B, D_in), jnp.float32),
                   jax.ShapeDtypeStruct((B, LANE), jnp.float32)),
        compiler_params=pltpu.CompilerParams(
            dimension_semantics=("parallel",)),    # shards batch tiles across v7x TCs
        cost_estimate=pl.CostEstimate(flops=flops,
                                      transcendentals=transcendentals,
                                      bytes_accessed=bytes_accessed),
    )(*in_arrays)

    mu = stats[:, 0:L]
    scale = stats[:, L:2 * L]
    zs = stats[:, 2 * L:3 * L]
    # constant likelihood scale returned as a scalar (broadcast at the consumer)
    px_scale = jnp.float32(likelihood_scale)
    return (mu, scale), (loc, px_scale), zs


# ------------------------------ main ------------------------------------------

if __name__ == "__main__":
    key = jax.random.PRNGKey(0)
    B, C, H, W = 2, 4, 16, 16          # small NCHW input
    D_in = C * H * W                   # 1024
    HID = 128
    LATENT = 16

    keys = jax.random.split(key, 8)

    # natural-shaped parameters (packed once below)
    enc_w1 = 0.02 * jax.random.normal(keys[0], (D_in, HID), jnp.float32)
    enc_b1 = jnp.zeros((HID,), jnp.float32)
    w_mu = 0.02 * jax.random.normal(keys[1], (HID, LATENT), jnp.float32)
    b_mu = jnp.zeros((LATENT,), jnp.float32)
    w_lv = 0.02 * jax.random.normal(keys[2], (HID, LATENT), jnp.float32)
    b_lv = jnp.zeros((LATENT,), jnp.float32)
    dec_w1 = 0.02 * jax.random.normal(keys[3], (LATENT, HID), jnp.float32)
    dec_b1 = jnp.zeros((HID,), jnp.float32)
    dec_w2 = 0.02 * jax.random.normal(keys[4], (HID, D_in), jnp.float32)
    dec_b2 = jnp.zeros((D_in,), jnp.float32)

    params = pack_vae_params(enc_w1=enc_w1, enc_b1=enc_b1,
                             w_mu=w_mu, b_mu=b_mu, w_lv=w_lv, b_lv=b_lv,
                             dec_w1=dec_w1, dec_b1=dec_b1,
                             dec_w2=dec_w2, dec_b2=dec_b2,
                             latent_dim=LATENT)

    x = jax.random.normal(keys[5], (B, C, H, W), jnp.float32)
    # reparameterization noise for rsample (K=1, already squeezed)
    # TODO(synk): could be generated in-kernel (pltpu.prng_seed + stateful_normal)
    # at the cost of diverging from the host jax.random stream.
    eps = jax.random.normal(keys[6], (B, LATENT), jnp.float32)

    fwd = jax.jit(functools.partial(vae_forward, latent_dim=LATENT))
    (mu, scale), (loc, px_scale), zs = fwd(x, params, eps)
    jax.block_until_ready((mu, scale, loc, px_scale, zs))

    # shape / sanity checks
    assert mu.shape == (B, LATENT) and scale.shape == (B, LATENT)
    assert zs.shape == (B, LATENT)
    assert loc.shape == (B, D_in)
    assert px_scale.shape == ()
    assert bool(jnp.all(scale > 0)) and bool(jnp.all((loc >= 0) & (loc <= 1)))

    # loose pure-JAX f32 reference (same packed weights, upcast) — kernel runs
    # bf16 matmuls with f32 accumulation, so compare with a relaxed tolerance.
    w1 = params['enc_w1'].astype(jnp.float32)
    wh = params['enc_wh'].astype(jnp.float32)
    dw1 = params['dec_w1'].astype(jnp.float32)
    dw2 = params['dec_w2'].astype(jnp.float32)
    xf = x.reshape(B, -1)
    h1_r = jnp.maximum(xf @ w1 + params['enc_b1'], 0.0)
    head_r = h1_r @ wh + params['enc_bh']
    mu_r = head_r[:, :LATENT]
    sc_r = jax.nn.softplus(head_r[:, LATENT:2 * LATENT]) + 1e-6
    z_r = mu_r + sc_r * eps
    zpad_r = jnp.zeros((B, LANE), jnp.float32).at[:, 2 * LATENT:3 * LATENT].set(z_r)
    h2_r = jnp.maximum(zpad_r @ dw1 + params['dec_b1'], 0.0)
    loc_r = jax.nn.sigmoid(h2_r @ dw2 + params['dec_b2'])

    assert bool(jnp.allclose(mu, mu_r, atol=3e-2, rtol=3e-2))
    assert bool(jnp.allclose(scale, sc_r, atol=3e-2, rtol=3e-2))
    assert bool(jnp.allclose(zs, z_r, atol=3e-2, rtol=3e-2))
    assert bool(jnp.allclose(loc, loc_r, atol=3e-2, rtol=3e-2))

    # TODO(synk): distribution objects (qz_x/px_z log_prob, generate/reconstruct/
    # infer/decode eval paths) are host-side torch.distributions glue, not kernels.

    print("KERNEL_OK")
</pallas_src>

<mosaic_0001>
module attributes {stable_mosaic.version = 11 : i64} {
  func.func @_vae_fused_kernel(%arg0: i32, %arg1: memref<2x1024xf32, #tpu.memory_space<vmem>>, %arg2: memref<2x16xf32, #tpu.memory_space<vmem>>, %arg3: memref<1024x128xbf16, #tpu.memory_space<vmem>>, %arg4: memref<1x128xf32, #tpu.memory_space<vmem>>, %arg5: memref<128x128xbf16, #tpu.memory_space<vmem>>, %arg6: memref<1x128xf32, #tpu.memory_space<vmem>>, %arg7: memref<128x128xbf16, #tpu.memory_space<vmem>>, %arg8: memref<1x128xf32, #tpu.memory_space<vmem>>, %arg9: memref<128x1024xbf16, #tpu.memory_space<vmem>>, %arg10: memref<1x1024xf32, #tpu.memory_space<vmem>>, %arg11: memref<2x1024xf32, #tpu.memory_space<vmem>>, %arg12: memref<2x128xf32, #tpu.memory_space<vmem>>) attributes {dimension_semantics = [#tpu.dimension_semantics<parallel>], iteration_bounds = array<i64: 1>, scalar_prefetch = 0 : i64, scratch_operands = 0 : i64, tpu.core_type = #tpu.core_type<tc>, window_params = [{transform_indices = @transform_0, window_bounds = array<i64: 2, 1024>}, {transform_indices = @transform_1, window_bounds = array<i64: 2, 16>}, {pipeline_mode = #tpu.pipeline_mode<synchronous>, transform_indices = @transform_2, window_bounds = array<i64: 1024, 128>}, {pipeline_mode = #tpu.pipeline_mode<synchronous>, transform_indices = @transform_3, window_bounds = array<i64: 1, 128>}, {pipeline_mode = #tpu.pipeline_mode<synchronous>, transform_indices = @transform_4, window_bounds = array<i64: 128, 128>}, {pipeline_mode = #tpu.pipeline_mode<synchronous>, transform_indices = @transform_5, window_bounds = array<i64: 1, 128>}, {pipeline_mode = #tpu.pipeline_mode<synchronous>, transform_indices = @transform_6, window_bounds = array<i64: 128, 128>}, {pipeline_mode = #tpu.pipeline_mode<synchronous>, transform_indices = @transform_7, window_bounds = array<i64: 1, 128>}, {pipeline_mode = #tpu.pipeline_mode<synchronous>, transform_indices = @transform_8, window_bounds = array<i64: 128, 1024>}, {pipeline_mode = #tpu.pipeline_mode<synchronous>, transform_indices = @transform_9, window_bounds = array<i64: 1, 1024>}, {transform_indices = @transform_10, window_bounds = array<i64: 2, 1024>}, {transform_indices = @transform_11, window_bounds = array<i64: 2, 128>}]} {
    %c0 = arith.constant 0 : index
    %c0_0 = arith.constant 0 : index
    %0 = vector.load %arg1[%c0, %c0_0] : memref<2x1024xf32, #tpu.memory_space<vmem>>, vector<2x1024xf32>
    %1 = arith.truncf %0 : vector<2x1024xf32> to vector<2x1024xbf16>
    %c0_1 = arith.constant 0 : index
    %c0_2 = arith.constant 0 : index
    %2 = vector.load %arg3[%c0_1, %c0_2] : memref<1024x128xbf16, #tpu.memory_space<vmem>>, vector<1024x128xbf16>
    %cst = arith.constant dense<0.000000e+00> : vector<2x128xf32>
    %3 = tpu.matmul %1, %2, %cst {dimension_numbers = #tpu.dot_dimension_numbers<[1], [0], [0], [1], [0, 0, 1, 1], [], []>} : vector<2x1024xbf16>, vector<1024x128xbf16>, vector<2x128xf32> -> vector<2x128xf32>
    %c0_3 = arith.constant 0 : index
    %c0_4 = arith.constant 0 : index
    %4 = vector.load %arg4[%c0_3, %c0_4] : memref<1x128xf32, #tpu.memory_space<vmem>>, vector<1x128xf32>
    %5 = vector.broadcast %4 : vector<1x128xf32> to vector<2x128xf32>
    %6 = arith.addf %3, %5 : vector<2x128xf32>
    %cst_5 = arith.constant 0.000000e+00 : f32
    %7 = vector.broadcast %cst_5 : f32 to vector<2x128xf32>
    %8 = arith.maximumf %6, %7 : vector<2x128xf32>
    %9 = arith.truncf %8 : vector<2x128xf32> to vector<2x128xbf16>
    %c0_6 = arith.constant 0 : index
    %c0_7 = arith.constant 0 : index
    %10 = vector.load %arg5[%c0_6, %c0_7] : memref<128x128xbf16, #tpu.memory_space<vmem>>, vector<128x128xbf16>
    %cst_8 = arith.constant dense<0.000000e+00> : vector<2x128xf32>
    %11 = tpu.matmul %9, %10, %cst_8 {dimension_numbers = #tpu.dot_dimension_numbers<[1], [0], [0], [1], [0, 0, 1, 1], [], []>} : vector<2x128xbf16>, vector<128x128xbf16>, vector<2x128xf32> -> vector<2x128xf32>
    %c0_9 = arith.constant 0 : index
    %c0_10 = arith.constant 0 : index
    %12 = vector.load %arg6[%c0_9, %c0_10] : memref<1x128xf32, #tpu.memory_space<vmem>>, vector<1x128xf32>
    %13 = vector.broadcast %12 : vector<1x128xf32> to vector<2x128xf32>
    %14 = arith.addf %11, %13 : vector<2x128xf32>
    %15 = vector.extract_strided_slice %14 {offsets = [0, 0], sizes = [2, 16], strides = [1, 1]} : vector<2x128xf32> to vector<2x16xf32>
    %16 = vector.extract_strided_slice %14 {offsets = [0, 16], sizes = [2, 16], strides = [1, 1]} : vector<2x128xf32> to vector<2x16xf32>
    %cst_11 = arith.constant 0.000000e+00 : f32
    %17 = vector.broadcast %cst_11 : f32 to vector<2x16xf32>
    %18 = arith.maximumf %16, %17 : vector<2x16xf32>
    %19 = vector.broadcast %cst_11 : f32 to vector<2x16xf32>
    %20 = arith.subf %16, %19 : vector<2x16xf32>
    %21 = arith.cmpf one, %20, %20 : vector<2x16xf32>
    %22 = vector.broadcast %cst_11 : f32 to vector<2x16xf32>
    %23 = arith.addf %16, %22 : vector<2x16xf32>
    %24 = math.absf %20 : vector<2x16xf32>
    %cst_12 = arith.constant 0.000000e+00 : f32
    %25 = vector.broadcast %cst_12 : f32 to vector<2x16xf32>
    %26 = arith.subf %25, %24 : vector<2x16xf32>
    %27 = math.exp %26 : vector<2x16xf32>
    %28 = math.log1p %27 : vector<2x16xf32>
    %29 = arith.addf %18, %28 : vector<2x16xf32>
    %30 = arith.select %21, %23, %29 : vector<2x16xi1>, vector<2x16xf32>
    %cst_13 = arith.constant 9.99999997E-7 : f32
    %31 = vector.broadcast %cst_13 : f32 to vector<2x16xf32>
    %32 = arith.addf %30, %31 : vector<2x16xf32>
    %c0_14 = arith.constant 0 : index
    %c0_15 = arith.constant 0 : index
    %33 = vector.load %arg2[%c0_14, %c0_15] : memref<2x16xf32, #tpu.memory_space<vmem>>, vector<2x16xf32>
    %34 = arith.mulf %32, %33 : vector<2x16xf32>
    %35 = arith.addf %15, %34 : vector<2x16xf32>
    %cst_16 = arith.constant 0.000000e+00 : f32
    %36 = vector.broadcast %cst_16 : f32 to vector<2x128xf32>
    %c0_17 = arith.constant 0 : index
    %c0_18 = arith.constant 0 : index
    %37 = vector.load %arg12[%c0_17, %c0_18] : memref<2x128xf32, #tpu.memory_space<vmem>>, vector<2x128xf32>
    tpu.vector_store %arg12[%c0_17, %c0_18], %36 {strides = array<i32>} : memref<2x128xf32, #tpu.memory_space<vmem>>, vector<2x128xf32>,
    %c0_19 = arith.constant 0 : index
    %c0_20 = arith.constant 0 : index
    %38 = vector.load %arg12[%c0_19, %c0_20] : memref<2x128xf32, #tpu.memory_space<vmem>>, vector<2x16xf32>
    tpu.vector_store %arg12[%c0_19, %c0_20], %15 {strides = array<i32>} : memref<2x128xf32, #tpu.memory_space<vmem>>, vector<2x16xf32>,
    %c0_21 = arith.constant 0 : index
    %c16 = arith.constant 16 : index
    %39 = vector.load %arg12[%c0_21, %c16] : memref<2x128xf32, #tpu.memory_space<vmem>>, vector<2x16xf32>
    tpu.vector_store %arg12[%c0_21, %c16], %32 {strides = array<i32>} : memref<2x128xf32, #tpu.memory_space<vmem>>, vector<2x16xf32>,
    %c0_22 = arith.constant 0 : index
    %c32 = arith.constant 32 : index
    %40 = vector.load %arg12[%c0_22, %c32] : memref<2x128xf32, #tpu.memory_space<vmem>>, vector<2x16xf32>
    tpu.vector_store %arg12[%c0_22, %c32], %35 {strides = array<i32>} : memref<2x128xf32, #tpu.memory_space<vmem>>, vector<2x16xf32>,
    %c0_23 = arith.constant 0 : index
    %c0_24 = arith.constant 0 : index
    %41 = vector.load %arg12[%c0_23, %c0_24] : memref<2x128xf32, #tpu.memory_space<vmem>>, vector<2x128xf32>
    %42 = arith.truncf %41 : vector<2x128xf32> to vector<2x128xbf16>
    %c0_25 = arith.constant 0 : index
    %c0_26 = arith.constant 0 : index
    %43 = vector.load %arg7[%c0_25, %c0_26] : memref<128x128xbf16, #tpu.memory_space<vmem>>, vector<128x128xbf16>
    %cst_27 = arith.constant dense<0.000000e+00> : vector<2x128xf32>
    %44 = tpu.matmul %42, %43, %cst_27 {dimension_numbers = #tpu.dot_dimension_numbers<[1], [0], [0], [1], [0, 0, 1, 1], [], []>} : vector<2x128xbf16>, vector<128x128xbf16>, vector<2x128xf32> -> vector<2x128xf32>
    %c0_28 = arith.constant 0 : index
    %c0_29 = arith.constant 0 : index
    %45 = vector.load %arg8[%c0_28, %c0_29] : memref<1x128xf32, #tpu.memory_space<vmem>>, vector<1x128xf32>
    %46 = vector.broadcast %45 : vector<1x128xf32> to vector<2x128xf32>
    %47 = arith.addf %44, %46 : vector<2x128xf32>
    %cst_30 = arith.constant 0.000000e+00 : f32
    %48 = vector.broadcast %cst_30 : f32 to vector<2x128xf32>
    %49 = arith.maximumf %47, %48 : vector<2x128xf32>
    %50 = arith.truncf %49 : vector<2x128xf32> to vector<2x128xbf16>
    %c0_31 = arith.constant 0 : index
    %c0_32 = arith.constant 0 : index
    %51 = vector.load %arg9[%c0_31, %c0_32] : memref<128x1024xbf16, #tpu.memory_space<vmem>>, vector<128x1024xbf16>
    %cst_33 = arith.constant dense<0.000000e+00> : vector<2x1024xf32>
    %52 = tpu.matmul %50, %51, %cst_33 {dimension_numbers = #tpu.dot_dimension_numbers<[1], [0], [0], [1], [0, 0, 1, 1], [], []>} : vector<2x128xbf16>, vector<128x1024xbf16>, vector<2x1024xf32> -> vector<2x1024xf32>
    %c0_34 = arith.constant 0 : index
    %c0_35 = arith.constant 0 : index
    %53 = vector.load %arg10[%c0_34, %c0_35] : memref<1x1024xf32, #tpu.memory_space<vmem>>, vector<1x1024xf32>
    %54 = vector.broadcast %53 : vector<1x1024xf32> to vector<2x1024xf32>
    %55 = arith.addf %52, %54 : vector<2x1024xf32>
    %56 = arith.negf %55 : vector<2x1024xf32>
    %57 = math.exp %56 : vector<2x1024xf32>
    %cst_36 = arith.constant 1.000000e+00 : f32
    %58 = vector.broadcast %cst_36 : f32 to vector<2x1024xf32>
    %59 = arith.addf %58, %57 : vector<2x1024xf32>
    %60 = arith.divf %58, %59 : vector<2x1024xf32>
    %c0_37 = arith.constant 0 : index
    %c0_38 = arith.constant 0 : index
    %61 = vector.load %arg11[%c0_37, %c0_38] : memref<2x1024xf32, #tpu.memory_space<vmem>>, vector<2x1024xf32>
    tpu.vector_store %arg11[%c0_37, %c0_38], %60 {strides = array<i32>} : memref<2x1024xf32, #tpu.memory_space<vmem>>, vector<2x1024xf32>,
    return
  }
  func.func @transform_0(%arg0: i32) -> (i32, i32) {
    %c0_i32 = arith.constant 0 : i32
    %c0_i32_0 = arith.constant 0 : i32
    return %arg0, %c0_i32 : i32, i32
  }
  func.func @transform_1(%arg0: i32) -> (i32, i32) {
    %c0_i32 = arith.constant 0 : i32
    %c0_i32_0 = arith.constant 0 : i32
    return %arg0, %c0_i32 : i32, i32
  }
  func.func @transform_2(%arg0: i32) -> (i32, i32) {
    %c0_i32 = arith.constant 0 : i32
    %c0_i32_0 = arith.constant 0 : i32
    %c0_i32_1 = arith.constant 0 : i32
    return %c0_i32, %c0_i32_0 : i32, i32
  }
  func.func @transform_3(%arg0: i32) -> (i32, i32) {
    %c0_i32 = arith.constant 0 : i32
    %c0_i32_0 = arith.constant 0 : i32
    %c0_i32_1 = arith.constant 0 : i32
    return %c0_i32, %c0_i32_0 : i32, i32
  }
  func.func @transform_4(%arg0: i32) -> (i32, i32) {
    %c0_i32 = arith.constant 0 : i32
    %c0_i32_0 = arith.constant 0 : i32
    %c0_i32_1 = arith.constant 0 : i32
    return %c0_i32, %c0_i32_0 : i32, i32
  }
  func.func @transform_5(%arg0: i32) -> (i32, i32) {
    %c0_i32 = arith.constant 0 : i32
    %c0_i32_0 = arith.constant 0 : i32
    %c0_i32_1 = arith.constant 0 : i32
    return %c0_i32, %c0_i32_0 : i32, i32
  }
  func.func @transform_6(%arg0: i32) -> (i32, i32) {
    %c0_i32 = arith.constant 0 : i32
    %c0_i32_0 = arith.constant 0 : i32
    %c0_i32_1 = arith.constant 0 : i32
    return %c0_i32, %c0_i32_0 : i32, i32
  }
  func.func @transform_7(%arg0: i32) -> (i32, i32) {
    %c0_i32 = arith.constant 0 : i32
    %c0_i32_0 = arith.constant 0 : i32
    %c0_i32_1 = arith.constant 0 : i32
    return %c0_i32, %c0_i32_0 : i32, i32
  }
  func.func @transform_8(%arg0: i32) -> (i32, i32) {
    %c0_i32 = arith.constant 0 : i32
    %c0_i32_0 = arith.constant 0 : i32
    %c0_i32_1 = arith.constant 0 : i32
    return %c0_i32, %c0_i32_0 : i32, i32
  }
  func.func @transform_9(%arg0: i32) -> (i32, i32) {
    %c0_i32 = arith.constant 0 : i32
    %c0_i32_0 = arith.constant 0 : i32
    %c0_i32_1 = arith.constant 0 : i32
    return %c0_i32, %c0_i32_0 : i32, i32
  }
  func.func @transform_10(%arg0: i32) -> (i32, i32) {
    %c0_i32 = arith.constant 0 : i32
    %c0_i32_0 = arith.constant 0 : i32
    return %arg0, %c0_i32 : i32, i32
  }
  func.func @transform_11(%arg0: i32) -> (i32, i32) {
    %c0_i32 = arith.constant 0 : i32
    %c0_i32_0 = arith.constant 0 : i32
    return %arg0, %c0_i32 : i32, i32
  }
}

</mosaic_0001>

<llo_original>
// kernel: vae_forward.1
$region0: #{vae_forward.1}
  #allocation0 [shape = 'u32[]', space=smem, size = 0x4, offset = 0x4, fixed_abs, tag = 'smem constant byte address 0x4 - core index']
  #allocation1 [shape = 'u32[72,128]{1,0:T(1,128)}', space=vmem, size = 0x9000, scoped, tag = 'internal scratch']
  %s0 = inlined_call_operand.vmem [shape: f32[2,1024], index: 0, kind: input, shape index: {}]
  %s1 = inlined_call_operand.vmem [shape: f32[2,16], index: 1, kind: input, shape index: {}]
  %s2 = inlined_call_operand.hbm [shape: bf16[1024,128], index: 2, kind: input, shape index: {}]
  %s3 = inlined_call_operand.vmem [shape: f32[1,128], index: 3, kind: input, shape index: {}]
  %s4 = inlined_call_operand.vmem [shape: bf16[128,128], index: 4, kind: input, shape index: {}]
  %s5 = inlined_call_operand.vmem [shape: f32[1,128], index: 5, kind: input, shape index: {}]
  %s6 = inlined_call_operand.vmem [shape: bf16[128,128], index: 6, kind: input, shape index: {}]
  %s7 = inlined_call_operand.vmem [shape: f32[1,128], index: 7, kind: input, shape index: {}]
  %s8 = inlined_call_operand.hbm [shape: bf16[128,1024], index: 8, kind: input, shape index: {}]
  %s9 = inlined_call_operand.vmem [shape: f32[1,1024], index: 9, kind: input, shape index: {}]
  %s10 = inlined_call_operand.hbm [shape: f32[2,1024], index: 10, kind: output, shape index: {0}]
  %s11 = inlined_call_operand.vmem [shape: f32[2,128], index: 11, kind: output, shape index: {1}]
  %12 = xla_tuple %s10, %s11
  %s13 = sld [smem:[#allocation0]]
  $region66: #{vae_forward.1} parent=0
    _
  %s15 = ssub.s32 1, %s13
  %s16 = scalar_select 0, %s15, %s13
  $region1: #{vae_forward.1} parent=0
    #allocation2 [shape = 'u8[262144]{0}', space=vmem, size = 0x40000, scoped, tag = 'input window, operand 2, single buffered']
    #allocation3 [shape = 's32[1]{0}', space=sflag, size = 0x4, scoped, tag = 'scoped memory for vae_forward.1']
    #allocation4 [shape = 's32[1]{0}', space=sflag, size = 0x4, scoped, tag = 'scoped memory for vae_forward.1']
    #allocation5 [shape = 'u8[262144]{0}', space=vmem, size = 0x40000, scoped, tag = 'input window, operand 8, single buffered']
    #allocation6 [shape = 's32[1]{0}', space=sflag, size = 0x4, scoped, tag = 'scoped memory for vae_forward.1']
    #allocation7 [shape = 'u8[8192]{0}', space=vmem, size = 0x2000, scoped, tag = 'output window, operand 0, single buffered']
    %17 = vsyncpa [#allocation3], 0
    %18 = vsyncpa [#allocation6], 0
    %19 = vsyncpa [#allocation4], 0
    // Predicated region
    $region2: #{vae_forward.1} parent=1 // pred_check
      _
    $region3: #{vae_forward.1} parent=1 // pred_check_branch
      %21 = sbr.rel (0) target = $region5
    $region4: #{vae_forward.1} parent=1 // pred_region
      _
    $region5: #{vae_forward.1} parent=1 // pred_fallthru
      _
    // Predicated region
    $region6: #{vae_forward.1} parent=1 // pred_check
      _
    $region7: #{vae_forward.1} parent=1 // pred_check_branch
      %23 = sbr.rel (0) target = $region9
    $region8: #{vae_forward.1} parent=1 // pred_region
      _
    $region9: #{vae_forward.1} parent=1 // pred_fallthru
      _
    // Predicated region
    $region10: #{vae_forward.1} parent=1 // pred_check
      _
    $region11: #{vae_forward.1} parent=1 // pred_check_branch
      %25 = sbr.rel (0) target = $region13
    $region12: #{vae_forward.1} parent=1 // pred_region
      %27 = vsyncadd [#allocation3], 0
      %s28 = sshll.u32 %s2, 4
      %s29 = int_to_ptr.hbm [resolvable:$true] %s28
      %s30 = sshll.u32 [#allocation2], 4
      %s31 = int_to_ptr.vmem [resolvable:$true] %s30
      %36 = dma.hbm_to_vmem [thread:$0]  %s29, 8192, %s31, [#allocation3], 64, 64, 4
    $region13: #{vae_forward.1} parent=1 // pred_fallthru
      _
    // Predicated region
    $region14: #{vae_forward.1} parent=1 // pred_check
      _
    $region15: #{vae_forward.1} parent=1 // pred_check_branch
      %38 = sbr.rel (0) target = $region17
    $region16: #{vae_forward.1} parent=1 // pred_region
      _
    $region17: #{vae_forward.1} parent=1 // pred_fallthru
      _
    // Predicated region
    $region18: #{vae_forward.1} parent=1 // pred_check
      _
    $region19: #{vae_forward.1} parent=1 // pred_check_branch
      %40 = sbr.rel (0) target = $region21
    $region20: #{vae_forward.1} parent=1 // pred_region
      _
    $region21: #{vae_forward.1} parent=1 // pred_fallthru
      _
    // Predicated region
    $region22: #{vae_forward.1} parent=1 // pred_check
      _
    $region23: #{vae_forward.1} parent=1 // pred_check_branch
      %42 = sbr.rel (0) target = $region25
    $region24: #{vae_forward.1} parent=1 // pred_region
      _
    $region25: #{vae_forward.1} parent=1 // pred_fallthru
      _
    // Predicated region
    $region26: #{vae_forward.1} parent=1 // pred_check
      _
    $region27: #{vae_forward.1} parent=1 // pred_check_branch
      %44 = sbr.rel (0) target = $region29
    $region28: #{vae_forward.1} parent=1 // pred_region
      _
    $region29: #{vae_forward.1} parent=1 // pred_fallthru
      _
    // Predicated region
    $region30: #{vae_forward.1} parent=1 // pred_check
      _
    $region31: #{vae_forward.1} parent=1 // pred_check_branch
      %46 = sbr.rel (0) target = $region33
    $region32: #{vae_forward.1} parent=1 // pred_region
      _
    $region33: #{vae_forward.1} parent=1 // pred_fallthru
      _
    // Predicated region
    $region34: #{vae_forward.1} parent=1 // pred_check
      _
    $region35: #{vae_forward.1} parent=1 // pred_check_branch
      %48 = sbr.rel (0) target = $region37
    $region36: #{vae_forward.1} parent=1 // pred_region
      %50 = vsyncadd [#allocation6], 0
      %s51 = sshll.u32 %s8, 4
      %s52 = int_to_ptr.hbm [resolvable:$true] %s51
      %s53 = sshll.u32 [#allocation5], 4
      %s54 = int_to_ptr.vmem [resolvable:$true] %s53
      %59 = dma.hbm_to_vmem [thread:$0]  %s52, 8192, %s54, [#allocation6], 512, 512, 32
    $region37: #{vae_forward.1} parent=1 // pred_fallthru
      _
    // Predicated region
    $region38: #{vae_forward.1} parent=1 // pred_check
      _
    $region39: #{vae_forward.1} parent=1 // pred_check_branch
      %61 = sbr.rel (0) target = $region41
    $region40: #{vae_forward.1} parent=1 // pred_region
      _
    $region41: #{vae_forward.1} parent=1 // pred_fallthru
      _
    // Predicated region
    $region42: #{vae_forward.1} parent=1 // pred_check
      _
    $region43: #{vae_forward.1} parent=1 // pred_check_branch
      %63 = sbr.rel (0) target = $region45
    $region44: #{vae_forward.1} parent=1 // pred_region
      %65 = dma.done [#allocation3], 8192
    $region45: #{vae_forward.1} parent=1 // pred_fallthru
      _
    // Predicated region
    $region46: #{vae_forward.1} parent=1 // pred_check
      _
    $region47: #{vae_forward.1} parent=1 // pred_check_branch
      %67 = sbr.rel (0) target = $region49
    $region48: #{vae_forward.1} parent=1 // pred_region
      %69 = dma.done [#allocation6], 8192
    $region49: #{vae_forward.1} parent=1 // pred_fallthru
      _
    %v70 = vld [vmem:[%s0] sm:$0xff]
    %v71 = vld [vmem:[%s0 + $0x8] sm:$0xff]
    %74 = vst [vmem:[#allocation1] ss:$4 sm:$0xff] %v70
    %s75 = scalar_lea.vmem [#allocation1], 32
    %76 = vst [vmem:[%s75] ss:$4 sm:$0xff] %v71
    %v77 = vld.sshfl [vmem:[#allocation1] sm:$0xff pattern:$0x73625140]
    %v78 = vld.sshfl [vmem:[#allocation1 + $0x8] sm:$0xff pattern:$0x73625140]
    %v79 = vld.sshfl [vmem:[#allocation1 + $0x10] sm:$0xff pattern:$0x73625140]
    %v80 = vld.sshfl [vmem:[#allocation1 + $0x18] sm:$0xff pattern:$0x73625140]
    %v81 = vld.sshfl [vmem:[#allocation1 + $0x20] sm:$0xff pattern:$0x73625140]
    %v82 = vld.sshfl [vmem:[#allocation1 + $0x28] sm:$0xff pattern:$0x73625140]
    %v83 = vld.sshfl [vmem:[#allocation1 + $0x30] sm:$0xff pattern:$0x73625140]
    %v84 = vld.sshfl [vmem:[#allocation1 + $0x38] sm:$0xff pattern:$0x73625140]
    %v93 = vpack.c.bf16 %v77, %v77
    %v94 = vpack.c.bf16 %v78, %v78
    %v95 = vpack.c.bf16 %v79, %v79
    %v96 = vpack.c.bf16 %v80, %v80
    %v97 = vpack.c.bf16 %v81, %v81
    %v98 = vpack.c.bf16 %v82, %v82
    %v99 = vpack.c.bf16 %v83, %v83
    %v100 = vpack.c.bf16 %v84, %v84
    %v101 = vld [vmem:[#allocation2] sm:$0xf]
    %v102 = vld [vmem:[#allocation2 + $0x4] sm:$0xf]
    %v103 = vld [vmem:[#allocation2 + $0x8] sm:$0xf]
    %v104 = vld [vmem:[#allocation2 + $0xc] sm:$0xf]
    %v105 = vld [vmem:[#allocation2 + $0x10] sm:$0xf]
    %v106 = vld [vmem:[#allocation2 + $0x14] sm:$0xf]
    %v107 = vld [vmem:[#allocation2 + $0x18] sm:$0xf]
    %v108 = vld [vmem:[#allocation2 + $0x1c] sm:$0xf]
    %v109 = vld [vmem:[#allocation2 + $0x20] sm:$0xf]
    %v110 = vld [vmem:[#allocation2 + $0x24] sm:$0xf]
    %v111 = vld [vmem:[#allocation2 + $0x28] sm:$0xf]
    %v112 = vld [vmem:[#allocation2 + $0x2c] sm:$0xf]
    %v113 = vld [vmem:[#allocation2 + $0x30] sm:$0xf]
    %v114 = vld [vmem:[#allocation2 + $0x34] sm:$0xf]
    %v115 = vld [vmem:[#allocation2 + $0x38] sm:$0xf]
    %v116 = vld [vmem:[#allocation2 + $0x3c] sm:$0xf]
    %v117 = vld [vmem:[#allocation2 + $0x40] sm:$0xf]
    %v118 = vld [vmem:[#allocation2 + $0x44] sm:$0xf]
    %v119 = vld [vmem:[#allocation2 + $0x48] sm:$0xf]
    %v120 = vld [vmem:[#allocation2 + $0x4c] sm:$0xf]
    %v121 = vld [vmem:[#allocation2 + $0x50] sm:$0xf]
    %v122 = vld [vmem:[#allocation2 + $0x54] sm:$0xf]
    %v123 = vld [vmem:[#allocation2 + $0x58] sm:$0xf]
    %v124 = vld [vmem:[#allocation2 + $0x5c] sm:$0xf]
    %v125 = vld [vmem:[#allocation2 + $0x60] sm:$0xf]
    %v126 = vld [vmem:[#allocation2 + $0x64] sm:$0xf]
    %v127 = vld [vmem:[#allocation2 + $0x68] sm:$0xf]
    %v128 = vld [vmem:[#allocation2 + $0x6c] sm:$0xf]
    %v129 = vld [vmem:[#allocation2 + $0x70] sm:$0xf]
    %v130 = vld [vmem:[#allocation2 + $0x74] sm:$0xf]
    %v131 = vld [vmem:[#allocation2 + $0x78] sm:$0xf]
    %v132 = vld [vmem:[#allocation2 + $0x7c] sm:$0xf]
    %v133 = vld [vmem:[#allocation2 + $0x80] sm:$0xf]
    %v134 = vld [vmem:[#allocation2 + $0x84] sm:$0xf]
    %v135 = vld [vmem:[#allocation2 + $0x88] sm:$0xf]
    %v136 = vld [vmem:[#allocation2 + $0x8c] sm:$0xf]
    %v137 = vld [vmem:[#allocation2 + $0x90] sm:$0xf]
    %v138 = vld [vmem:[#allocation2 + $0x94] sm:$0xf]
    %v139 = vld [vmem:[#allocation2 + $0x98] sm:$0xf]
    %v140 = vld [vmem:[#allocation2 + $0x9c] sm:$0xf]
    %v141 = vld [vmem:[#allocation2 + $0xa0] sm:$0xf]
    %v142 = vld [vmem:[#allocation2 + $0xa4] sm:$0xf]
    %v143 = vld [vmem:[#allocation2 + $0xa8] sm:$0xf]
    %v144 = vld [vmem:[#allocation2 + $0xac] sm:$0xf]
    %v145 = vld [vmem:[#allocation2 + $0xb0] sm:$0xf]
    %v146 = vld [vmem:[#allocation2 + $0xb4] sm:$0xf]
    %v147 = vld [vmem:[#allocation2 + $0xb8] sm:$0xf]
    %v148 = vld [vmem:[#allocation2 + $0xbc] sm:$0xf]
    %v149 = vld [vmem:[#allocation2 + $0xc0] sm:$0xf]
    %v150 = vld [vmem:[#allocation2 + $0xc4] sm:$0xf]
    %v151 = vld [vmem:[#allocation2 + $0xc8] sm:$0xf]
    %v152 = vld [vmem:[#allocation2 + $0xcc] sm:$0xf]
    %v153 = vld [vmem:[#allocation2 + $0xd0] sm:$0xf]
    %v154 = vld [vmem:[#allocation2 + $0xd4] sm:$0xf]
    %v155 = vld [vmem:[#allocation2 + $0xd8] sm:$0xf]
    %v156 = vld [vmem:[#allocation2 + $0xdc] sm:$0xf]
    %v157 = vld [vmem:[#allocation2 + $0xe0] sm:$0xf]
    %v158 = vld [vmem:[#allocation2 + $0xe4] sm:$0xf]
    %v159 = vld [vmem:[#allocation2 + $0xe8] sm:$0xf]
    %v160 = vld [vmem:[#allocation2 + $0xec] sm:$0xf]
    %v161 = vld [vmem:[#allocation2 + $0xf0] sm:$0xf]
    %v162 = vld [vmem:[#allocation2 + $0xf4] sm:$0xf]
    %v163 = vld [vmem:[#allocation2 + $0xf8] sm:$0xf]
    %v164 = vld [vmem:[#allocation2 + $0xfc] sm:$0xf]
    %v165 = vld [vmem:[#allocation2 + $0x100] sm:$0xf]
    %v166 = vld [vmem:[#allocation2 + $0x104] sm:$0xf]
    %v167 = vld [vmem:[#allocation2 + $0x108] sm:$0xf]
    %v168 = vld [vmem:[#allocation2 + $0x10c] sm:$0xf]
    %v169 = vld [vmem:[#allocation2 + $0x110] sm:$0xf]
    %v170 = vld [vmem:[#allocation2 + $0x114] sm:$0xf]
    %v171 = vld [vmem:[#allocation2 + $0x118] sm:$0xf]
    %v172 = vld [vmem:[#allocation2 + $0x11c] sm:$0xf]
    %v173 = vld [vmem:[#allocation2 + $0x120] sm:$0xf]
    %v174 = vld [vmem:[#allocation2 + $0x124] sm:$0xf]
    %v175 = vld [vmem:[#allocation2 + $0x128] sm:$0xf]
    %v176 = vld [vmem:[#allocation2 + $0x12c] sm:$0xf]
    %v177 = vld [vmem:[#allocation2 + $0x130] sm:$0xf]
    %v178 = vld [vmem:[#allocation2 + $0x134] sm:$0xf]
    %v179 = vld [vmem:[#allocation2 + $0x138] sm:$0xf]
    %v180 = vld [vmem:[#allocation2 + $0x13c] sm:$0xf]
    %v181 = vld [vmem:[#allocation2 + $0x140] sm:$0xf]
    %v182 = vld [vmem:[#allocation2 + $0x144] sm:$0xf]
    %v183 = vld [vmem:[#allocation2 + $0x148] sm:$0xf]
    %v184 = vld [vmem:[#allocation2 + $0x14c] sm:$0xf]
    %v185 = vld [vmem:[#allocation2 + $0x150] sm:$0xf]
    %v186 = vld [vmem:[#allocation2 + $0x154] sm:$0xf]
    %v187 = vld [vmem:[#allocation2 + $0x158] sm:$0xf]
    %v188 = vld [vmem:[#allocation2 + $0x15c] sm:$0xf]
    %v189 = vld [vmem:[#allocation2 + $0x160] sm:$0xf]
    %v190 = vld [vmem:[#allocation2 + $0x164] sm:$0xf]
    %v191 = vld [vmem:[#allocation2 + $0x168] sm:$0xf]
    %v192 = vld [vmem:[#allocation2 + $0x16c] sm:$0xf]
    %v193 = vld [vmem:[#allocation2 + $0x170] sm:$0xf]
    %v194 = vld [vmem:[#allocation2 + $0x174] sm:$0xf]
    %v195 = vld [vmem:[#allocation2 + $0x178] sm:$0xf]
    %v196 = vld [vmem:[#allocation2 + $0x17c] sm:$0xf]
    %v197 = vld [vmem:[#allocation2 + $0x180] sm:$0xf]
    %v198 = vld [vmem:[#allocation2 + $0x184] sm:$0xf]
    %v199 = vld [vmem:[#allocation2 + $0x188] sm:$0xf]
    %v200 = vld [vmem:[#allocation2 + $0x18c] sm:$0xf]
    %v201 = vld [vmem:[#allocation2 + $0x190] sm:$0xf]
    %v202 = vld [vmem:[#allocation2 + $0x194] sm:$0xf]
    %v203 = vld [vmem:[#allocation2 + $0x198] sm:$0xf]
    %v204 = vld [vmem:[#allocation2 + $0x19c] sm:$0xf]
    %v205 = vld [vmem:[#allocation2 + $0x1a0] sm:$0xf]
    %v206 = vld [vmem:[#allocation2 + $0x1a4] sm:$0xf]
    %v207 = vld [vmem:[#allocation2 + $0x1a8] sm:$0xf]
    %v208 = vld [vmem:[#allocation2 + $0x1ac] sm:$0xf]
    %v209 = vld [vmem:[#allocation2 + $0x1b0] sm:$0xf]
    %v210 = vld [vmem:[#allocation2 + $0x1b4] sm:$0xf]
    %v211 = vld [vmem:[#allocation2 + $0x1b8] sm:$0xf]
    %v212 = vld [vmem:[#allocation2 + $0x1bc] sm:$0xf]
    %v213 = vld [vmem:[#allocation2 + $0x1c0] sm:$0xf]
    %v214 = vld [vmem:[#allocation2 + $0x1c4] sm:$0xf]
    %v215 = vld [vmem:[#allocation2 + $0x1c8] sm:$0xf]
    %v216 = vld [vmem:[#allocation2 + $0x1cc] sm:$0xf]
    %v217 = vld [vmem:[#allocation2 + $0x1d0] sm:$0xf]
    %v218 = vld [vmem:[#allocation2 + $0x1d4] sm:$0xf]
    %v219 = vld [vmem:[#allocation2 + $0x1d8] sm:$0xf]
    %v220 = vld [vmem:[#allocation2 + $0x1dc] sm:$0xf]
    %v221 = vld [vmem:[#allocation2 + $0x1e0] sm:$0xf]
    %v222 = vld [vmem:[#allocation2 + $0x1e4] sm:$0xf]
    %v223 = vld [vmem:[#allocation2 + $0x1e8] sm:$0xf]
    %v224 = vld [vmem:[#allocation2 + $0x1ec] sm:$0xf]
    %v225 = vld [vmem:[#allocation2 + $0x1f0] sm:$0xf]
    %v226 = vld [vmem:[#allocation2 + $0x1f4] sm:$0xf]
    %v227 = vld [vmem:[#allocation2 + $0x1f8] sm:$0xf]
    %v228 = vld [vmem:[#allocation2 + $0x1fc] sm:$0xf]
    %v229 = vld [vmem:[%s3] sm:$0x1]
    %v231 = vperm.slane %v229, 0
    %v361 = vunpack.c.l.b16 %v101
    %v362 = vunpack.c.l.b16 %v102
    %v363 = vunpack.c.l.b16 %v103
    %v364 = vunpack.c.l.b16 %v104
    %v365 = vunpack.c.l.b16 %v105
    %v366 = vunpack.c.l.b16 %v106
    %v367 = vunpack.c.l.b16 %v107
    %v368 = vunpack.c.l.b16 %v108
    %v369 = vunpack.c.l.b16 %v109
    %v370 = vunpack.c.l.b16 %v110
    %v371 = vunpack.c.l.b16 %v111
    %v372 = vunpack.c.l.b16 %v112
    %v373 = vunpack.c.l.b16 %v113
    %v374 = vunpack.c.l.b16 %v114
    %v375 = vunpack.c.l.b16 %v115
    %v376 = vunpack.c.l.b16 %v116
    %v377 = vunpack.c.l.b16 %v117
    %v378 = vunpack.c.l.b16 %v118
    %v379 = vunpack.c.l.b16 %v119
    %v380 = vunpack.c.l.b16 %v120
    %v381 = vunpack.c.l.b16 %v121
    %v382 = vunpack.c.l.b16 %v122
    %v383 = vunpack.c.l.b16 %v123
    %v384 = vunpack.c.l.b16 %v124
    %v385 = vunpack.c.l.b16 %v125
    %v386 = vunpack.c.l.b16 %v126
    %v387 = vunpack.c.l.b16 %v127
    %v388 = vunpack.c.l.b16 %v128
    %v389 = vunpack.c.l.b16 %v129
    %v390 = vunpack.c.l.b16 %v130
    %v391 = vunpack.c.l.b16 %v131
    %v392 = vunpack.c.l.b16 %v132
    %v393 = vunpack.c.l.b16 %v133
    %v394 = vunpack.c.l.b16 %v134
    %v395 = vunpack.c.l.b16 %v135
    %v396 = vunpack.c.l.b16 %v136
    %v397 = vunpack.c.l.b16 %v137
    %v398 = vunpack.c.l.b16 %v138
    %v399 = vunpack.c.l.b16 %v139
    %v400 = vunpack.c.l.b16 %v140
    %v401 = vunpack.c.l.b16 %v141
    %v402 = vunpack.c.l.b16 %v142
    %v403 = vunpack.c.l.b16 %v143
    %v404 = vunpack.c.l.b16 %v144
    %v405 = vunpack.c.l.b16 %v145
    %v406 = vunpack.c.l.b16 %v146
    %v407 = vunpack.c.l.b16 %v147
    %v408 = vunpack.c.l.b16 %v148
    %v409 = vunpack.c.l.b16 %v149
    %v410 = vunpack.c.l.b16 %v150
    %v411 = vunpack.c.l.b16 %v151
    %v412 = vunpack.c.l.b16 %v152
    %v413 = vunpack.c.l.b16 %v153
    %v414 = vunpack.c.l.b16 %v154
    %v415 = vunpack.c.l.b16 %v155
    %v416 = vunpack.c.l.b16 %v156
    %v417 = vunpack.c.l.b16 %v157
    %v418 = vunpack.c.l.b16 %v158
    %v419 = vunpack.c.l.b16 %v159
    %v420 = vunpack.c.l.b16 %v160
    %v421 = vunpack.c.l.b16 %v161
    %v422 = vunpack.c.l.b16 %v162
    %v423 = vunpack.c.l.b16 %v163
    %v424 = vunpack.c.l.b16 %v164
    %v425 = vunpack.c.l.b16 %v165
    %v426 = vunpack.c.l.b16 %v166
    %v427 = vunpack.c.l.b16 %v167
    %v428 = vunpack.c.l.b16 %v168
    %v429 = vunpack.c.l.b16 %v169
    %v430 = vunpack.c.l.b16 %v170
    %v431 = vunpack.c.l.b16 %v171
    %v432 = vunpack.c.l.b16 %v172
    %v433 = vunpack.c.l.b16 %v173
    %v434 = vunpack.c.l.b16 %v174
    %v435 = vunpack.c.l.b16 %v175
    %v436 = vunpack.c.l.b16 %v176
    %v437 = vunpack.c.l.b16 %v177
    %v438 = vunpack.c.l.b16 %v178
    %v439 = vunpack.c.l.b16 %v179
    %v440 = vunpack.c.l.b16 %v180
    %v441 = vunpack.c.l.b16 %v181
    %v442 = vunpack.c.l.b16 %v182
    %v443 = vunpack.c.l.b16 %v183
    %v444 = vunpack.c.l.b16 %v184
    %v445 = vunpack.c.l.b16 %v185
    %v446 = vunpack.c.l.b16 %v186
    %v447 = vunpack.c.l.b16 %v187
    %v448 = vunpack.c.l.b16 %v188
    %v449 = vunpack.c.l.b16 %v189
    %v450 = vunpack.c.l.b16 %v190
    %v451 = vunpack.c.l.b16 %v191
    %v452 = vunpack.c.l.b16 %v192
    %v453 = vunpack.c.l.b16 %v193
    %v454 = vunpack.c.l.b16 %v194
    %v455 = vunpack.c.l.b16 %v195
    %v456 = vunpack.c.l.b16 %v196
    %v457 = vunpack.c.l.b16 %v197
    %v458 = vunpack.c.l.b16 %v198
    %v459 = vunpack.c.l.b16 %v199
    %v460 = vunpack.c.l.b16 %v200
    %v461 = vunpack.c.l.b16 %v201
    %v462 = vunpack.c.l.b16 %v202
    %v463 = vunpack.c.l.b16 %v203
    %v464 = vunpack.c.l.b16 %v204
    %v465 = vunpack.c.l.b16 %v205
    %v466 = vunpack.c.l.b16 %v206
    %v467 = vunpack.c.l.b16 %v207
    %v468 = vunpack.c.l.b16 %v208
    %v469 = vunpack.c.l.b16 %v209
    %v470 = vunpack.c.l.b16 %v210
    %v471 = vunpack.c.l.b16 %v211
    %v472 = vunpack.c.l.b16 %v212
    %v473 = vunpack.c.l.b16 %v213
    %v474 = vunpack.c.l.b16 %v214
    %v475 = vunpack.c.l.b16 %v215
    %v476 = vunpack.c.l.b16 %v216
    %v477 = vunpack.c.l.b16 %v217
    %v478 = vunpack.c.l.b16 %v218
    %v479 = vunpack.c.l.b16 %v219
    %v480 = vunpack.c.l.b16 %v220
    %v481 = vunpack.c.l.b16 %v221
    %v482 = vunpack.c.l.b16 %v222
    %v483 = vunpack.c.l.b16 %v223
    %v484 = vunpack.c.l.b16 %v224
    %v485 = vunpack.c.l.b16 %v225
    %v486 = vunpack.c.l.b16 %v226
    %v487 = vunpack.c.l.b16 %v227
    %v488 = vunpack.c.l.b16 %v228
    %v489 = vpack.c.b16 %v362, %v361
    %v490 = vpack.c.b16 %v364, %v363
    %v491 = vpack.c.b16 %v366, %v365
    %v492 = vpack.c.b16 %v368, %v367
    %v493 = vpack.c.b16 %v370, %v369
    %v494 = vpack.c.b16 %v372, %v371
    %v495 = vpack.c.b16 %v374, %v373
    %v496 = vpack.c.b16 %v376, %v375
    %v497 = vpack.c.b16 %v378, %v377
    %v498 = vpack.c.b16 %v380, %v379
    %v499 = vpack.c.b16 %v382, %v381
    %v500 = vpack.c.b16 %v384, %v383
    %v501 = vpack.c.b16 %v386, %v385
    %v502 = vpack.c.b16 %v388, %v387
    %v503 = vpack.c.b16 %v390, %v389
    %v504 = vpack.c.b16 %v392, %v391
    %v505 = vpack.c.b16 %v394, %v393
    %v506 = vpack.c.b16 %v396, %v395
    %v507 = vpack.c.b16 %v398, %v397
    %v508 = vpack.c.b16 %v400, %v399
    %v509 = vpack.c.b16 %v402, %v401
    %v510 = vpack.c.b16 %v404, %v403
    %v511 = vpack.c.b16 %v406, %v405
    %v512 = vpack.c.b16 %v408, %v407
    %v513 = vpack.c.b16 %v410, %v409
    %v514 = vpack.c.b16 %v412, %v411
    %v515 = vpack.c.b16 %v414, %v413
    %v516 = vpack.c.b16 %v416, %v415
    %v517 = vpack.c.b16 %v418, %v417
    %v518 = vpack.c.b16 %v420, %v419
    %v519 = vpack.c.b16 %v422, %v421
    %v520 = vpack.c.b16 %v424, %v423
    %v521 = vpack.c.b16 %v426, %v425
    %v522 = vpack.c.b16 %v428, %v427
    %v523 = vpack.c.b16 %v430, %v429
    %v524 = vpack.c.b16 %v432, %v431
    %v525 = vpack.c.b16 %v434, %v433
    %v526 = vpack.c.b16 %v436, %v435
    %v527 = vpack.c.b16 %v438, %v437
    %v528 = vpack.c.b16 %v440, %v439
    %v529 = vpack.c.b16 %v442, %v441
    %v530 = vpack.c.b16 %v444, %v443
    %v531 = vpack.c.b16 %v446, %v445
    %v532 = vpack.c.b16 %v448, %v447
    %v533 = vpack.c.b16 %v450, %v449
    %v534 = vpack.c.b16 %v452, %v451
    %v535 = vpack.c.b16 %v454, %v453
    %v536 = vpack.c.b16 %v456, %v455
    %v537 = vpack.c.b16 %v458, %v457
    %v538 = vpack.c.b16 %v460, %v459
    %v539 = vpack.c.b16 %v462, %v461
    %v540 = vpack.c.b16 %v464, %v463
    %v541 = vpack.c.b16 %v466, %v465
    %v542 = vpack.c.b16 %v468, %v467
    %v543 = vpack.c.b16 %v470, %v469
    %v544 = vpack.c.b16 %v472, %v471
    %v545 = vpack.c.b16 %v474, %v473
    %v546 = vpack.c.b16 %v476, %v475
    %v547 = vpack.c.b16 %v478, %v477
    %v548 = vpack.c.b16 %v480, %v479
    %v549 = vpack.c.b16 %v482, %v481
    %v550 = vpack.c.b16 %v484, %v483
    %v551 = vpack.c.b16 %v486, %v485
    %v552 = vpack.c.b16 %v488, %v487
    %617 = vmatpush.bf16.msra.mxu0 %v496
    %618 = vmatpush.bf16.msra.mxu0 %v495
    %619 = vmatpush.bf16.msra.mxu0 %v494
    %620 = vmatpush.bf16.msra.mxu0 %v493
    %621 = vmatpush.bf16.msra.mxu0 %v492
    %622 = vmatpush.bf16.msra.mxu0 %v491
    %623 = vmatpush.bf16.msra.mxu0 %v490
    %624 = vmatpush.bf16.msra.mxu0 %v489
    %625 = vmatmul.bf16.gmra.mxu0 %v93
    %v626 = vpop.f32.mrf.mxu0
    %v627 = vadd.f32 %v231, %v626
    %v628 = vpop.f32.mrf.mxu0
    %629 = vdwg.mxu0
    %630 = vmatpush.bf16.msra.mxu0 %v504
    %631 = vmatpush.bf16.msra.mxu0 %v503
    %632 = vmatpush.bf16.msra.mxu0 %v502
    %633 = vmatpush.bf16.msra.mxu0 %v501
    %634 = vmatpush.bf16.msra.mxu0 %v500
    %635 = vmatpush.bf16.msra.mxu0 %v499
    %636 = vmatpush.bf16.msra.mxu0 %v498
    %637 = vmatpush.bf16.msra.mxu0 %v497
    %638 = vmatmul.bf16.gmra.mxu0 %v94
    %v639 = vpop.f32.mrf.mxu0
    %v640 = vadd.f32 %v627, %v639
    %v641 = vpop.f32.mrf.mxu0
    %642 = vdwg.mxu0
    %643 = vmatpush.bf16.msra.mxu0 %v512
    %644 = vmatpush.bf16.msra.mxu0 %v511
    %645 = vmatpush.bf16.msra.mxu0 %v510
    %646 = vmatpush.bf16.msra.mxu0 %v509
    %647 = vmatpush.bf16.msra.mxu0 %v508
    %648 = vmatpush.bf16.msra.mxu0 %v507
    %649 = vmatpush.bf16.msra.mxu0 %v506
    %650 = vmatpush.bf16.msra.mxu0 %v505
    %651 = vmatmul.bf16.gmra.mxu0 %v95
    %v652 = vpop.f32.mrf.mxu0
    %v653 = vadd.f32 %v640, %v652
    %v654 = vpop.f32.mrf.mxu0
    %655 = vdwg.mxu0
    %656 = vmatpush.bf16.msra.mxu0 %v520
    %657 = vmatpush.bf16.msra.mxu0 %v519
    %658 = vmatpush.bf16.msra.mxu0 %v518
    %659 = vmatpush.bf16.msra.mxu0 %v517
    %660 = vmatpush.bf16.msra.mxu0 %v516
    %661 = vmatpush.bf16.msra.mxu0 %v515
    %662 = vmatpush.bf16.msra.mxu0 %v514
    %663 = vmatpush.bf16.msra.mxu0 %v513
    %664 = vmatmul.bf16.gmra.mxu0 %v96
    %v665 = vpop.f32.mrf.mxu0
    %v666 = vadd.f32 %v653, %v665
    %v667 = vpop.f32.mrf.mxu0
    %668 = vdwg.mxu0
    %669 = vmatpush.bf16.msra.mxu0 %v528
    %670 = vmatpush.bf16.msra.mxu0 %v527
    %671 = vmatpush.bf16.msra.mxu0 %v526
    %672 = vmatpush.bf16.msra.mxu0 %v525
    %673 = vmatpush.bf16.msra.mxu0 %v524
    %674 = vmatpush.bf16.msra.mxu0 %v523
    %675 = vmatpush.bf16.msra.mxu0 %v522
    %676 = vmatpush.bf16.msra.mxu0 %v521
    %677 = vmatmul.bf16.gmra.mxu0 %v97
    %v678 = vpop.f32.mrf.mxu0
    %v679 = vadd.f32 %v666, %v678
    %v680 = vpop.f32.mrf.mxu0
    %681 = vdwg.mxu0
    %682 = vmatpush.bf16.msra.mxu0 %v536
    %683 = vmatpush.bf16.msra.mxu0 %v535
    %684 = vmatpush.bf16.msra.mxu0 %v534
    %685 = vmatpush.bf16.msra.mxu0 %v533
    %686 = vmatpush.bf16.msra.mxu0 %v532
    %687 = vmatpush.bf16.msra.mxu0 %v531
    %688 = vmatpush.bf16.msra.mxu0 %v530
    %689 = vmatpush.bf16.msra.mxu0 %v529
    %690 = vmatmul.bf16.gmra.mxu0 %v98
    %v691 = vpop.f32.mrf.mxu0
    %v692 = vadd.f32 %v679, %v691
    %v693 = vpop.f32.mrf.mxu0
    %694 = vdwg.mxu0
    %695 = vmatpush.bf16.msra.mxu0 %v544
    %696 = vmatpush.bf16.msra.mxu0 %v543
    %697 = vmatpush.bf16.msra.mxu0 %v542
    %698 = vmatpush.bf16.msra.mxu0 %v541
    %699 = vmatpush.bf16.msra.mxu0 %v540
    %700 = vmatpush.bf16.msra.mxu0 %v539
    %701 = vmatpush.bf16.msra.mxu0 %v538
    %702 = vmatpush.bf16.msra.mxu0 %v537
    %703 = vmatmul.bf16.gmra.mxu0 %v99
    %v704 = vpop.f32.mrf.mxu0
    %v705 = vadd.f32 %v692, %v704
    %v706 = vpop.f32.mrf.mxu0
    %707 = vdwg.mxu0
    %708 = vmatpush.bf16.msra.mxu0 %v552
    %709 = vmatpush.bf16.msra.mxu0 %v551
    %710 = vmatpush.bf16.msra.mxu0 %v550
    %711 = vmatpush.bf16.msra.mxu0 %v549
    %712 = vmatpush.bf16.msra.mxu0 %v548
    %713 = vmatpush.bf16.msra.mxu0 %v547
    %714 = vmatpush.bf16.msra.mxu0 %v546
    %715 = vmatpush.bf16.msra.mxu0 %v545
    %716 = vmatmul.bf16.gmra.mxu0 %v100
    %v717 = vpop.f32.mrf.mxu0
    %v718 = vadd.f32 %v705, %v717
    %v719 = vpop.f32.mrf.mxu0
    %720 = vdwg.mxu0
    %v721 = vmax.f32 %v718, 0.0
    %v722 = vpack.c.bf16 %v721, %v721
    %v723 = vld [vmem:[%s4] sm:$0xf]
    %v724 = vld [vmem:[%s4 + $0x4] sm:$0xf]
    %v725 = vld [vmem:[%s4 + $0x8] sm:$0xf]
    %v726 = vld [vmem:[%s4 + $0xc] sm:$0xf]
    %v727 = vld [vmem:[%s4 + $0x10] sm:$0xf]
    %v728 = vld [vmem:[%s4 + $0x14] sm:$0xf]
    %v729 = vld [vmem:[%s4 + $0x18] sm:$0xf]
    %v730 = vld [vmem:[%s4 + $0x1c] sm:$0xf]
    %v731 = vld [vmem:[%s4 + $0x20] sm:$0xf]
    %v732 = vld [vmem:[%s4 + $0x24] sm:$0xf]
    %v733 = vld [vmem:[%s4 + $0x28] sm:$0xf]
    %v734 = vld [vmem:[%s4 + $0x2c] sm:$0xf]
    %v735 = vld [vmem:[%s4 + $0x30] sm:$0xf]
    %v736 = vld [vmem:[%s4 + $0x34] sm:$0xf]
    %v737 = vld [vmem:[%s4 + $0x38] sm:$0xf]
    %v738 = vld [vmem:[%s4 + $0x3c] sm:$0xf]
    %v739 = vld [vmem:[%s5] sm:$0x1]
    %v741 = vperm.slane %v739, 0
    %v759 = vunpack.c.l.b16 %v723
    %v760 = vunpack.c.l.b16 %v724
    %v761 = vunpack.c.l.b16 %v725
    %v762 = vunpack.c.l.b16 %v726
    %v763 = vunpack.c.l.b16 %v727
    %v764 = vunpack.c.l.b16 %v728
    %v765 = vunpack.c.l.b16 %v729
    %v766 = vunpack.c.l.b16 %v730
    %v767 = vunpack.c.l.b16 %v731
    %v768 = vunpack.c.l.b16 %v732
    %v769 = vunpack.c.l.b16 %v733
    %v770 = vunpack.c.l.b16 %v734
    %v771 = vunpack.c.l.b16 %v735
    %v772 = vunpack.c.l.b16 %v736
    %v773 = vunpack.c.l.b16 %v737
    %v774 = vunpack.c.l.b16 %v738
    %v775 = vpack.c.b16 %v760, %v759
    %v776 = vpack.c.b16 %v762, %v761
    %v777 = vpack.c.b16 %v764, %v763
    %v778 = vpack.c.b16 %v766, %v765
    %v779 = vpack.c.b16 %v768, %v767
    %v780 = vpack.c.b16 %v770, %v769
    %v781 = vpack.c.b16 %v772, %v771
    %v782 = vpack.c.b16 %v774, %v773
    %791 = vmatpush.bf16.msra.mxu0 %v782
    %792 = vmatpush.bf16.msra.mxu0 %v781
    %793 = vmatpush.bf16.msra.mxu0 %v780
    %794 = vmatpush.bf16.msra.mxu0 %v779
    %795 = vmatpush.bf16.msra.mxu0 %v778
    %796 = vmatpush.bf16.msra.mxu0 %v777
    %797 = vmatpush.bf16.msra.mxu0 %v776
    %798 = vmatpush.bf16.msra.mxu0 %v775
    %799 = vmatmul.bf16.gmra.mxu0 %v722
    %v800 = vpop.f32.mrf.mxu0
    %v801 = vadd.f32 %v741, %v800
    %v802 = vpop.f32.mrf.mxu0
    %803 = vdwg.mxu0
    %v804 = vmax.f32 %v801, 0.0
    %vm805 = vcmp.ne.f32.partialorder %v801, %v801
    %v806 = vadd.f32 %v801, 0.0
    %v807 = vand.u32 2147483647, %v801
    %v808 = vsub.f32 0.0, %v807
    %v809 = vmul.f32 %v808, 1.442695
    %v810 = vpow.pop %v809
    %v811 = vadd.f32 %v810, 1.0
    %v812 = vlog2.pop %v811
    %v813 = vmul.f32 %v812, 0.6931472
    %v814 = vmul.f32 -0.5, %v810
    %v815 = vadd.f32 %v814, 1.0
    %v816 = vmul.f32 %v815, %v810
    %v817 = vand.u32 2147483647, %v810
    %vm818 = vcmp.lt.f32.partialorder %v817, 0.0004427343
    %v819 = vsel %vm818, %v816, %v813
    %v820 = vadd.f32 %v804, %v819
    %v821 = vsel %vm805, %v806, %v820
    %v822 = vadd.f32 %v821, 1e-06
    %v823 = vld [vmem:[%s1] sm:$0x3]
    %825 = vrot.lane.b32.xlu0 %v823, 16
    %v826 = vpop.permute.xlu0 %825
    %v828 = vmul.f32 %v822, %v826
    %830 = vrot.lane.b32.xlu0 %v828, 112
    %v831 = vpop.permute.xlu0 %830
    %v833 = vadd.f32 %v801, %v831
    %834 = vst [vmem:[%s11] sm:$0x3] 0.0
    %vm835 = vcmask 123904
    %836 = vst.msk [vmem:[%s11] sm:$0x3] %vm835, %v801
    %vm837 = vcmask 255104
    %838 = vst.msk [vmem:[%s11] sm:$0x3] %vm837, %v822
    %840 = vrot.lane.b32.xlu0 %v833, 32
    %v841 = vpop.permute.xlu0 %840
    %vm843 = vcmask 386304
    %844 = vst.msk [vmem:[%s11] sm:$0x3] %vm843, %v841
    %v845 = vld [vmem:[%s11] sm:$0x3]
    %v846 = vpack.c.bf16 %v845, %v845
    %v847 = vld [vmem:[%s6] sm:$0xf]
    %v848 = vld [vmem:[%s6 + $0x4] sm:$0xf]
    %v849 = vld [vmem:[%s6 + $0x8] sm:$0xf]
    %v850 = vld [vmem:[%s6 + $0xc] sm:$0xf]
    %v851 = vld [vmem:[%s6 + $0x10] sm:$0xf]
    %v852 = vld [vmem:[%s6 + $0x14] sm:$0xf]
    %v853 = vld [vmem:[%s6 + $0x18] sm:$0xf]
    %v854 = vld [vmem:[%s6 + $0x1c] sm:$0xf]
    %v855 = vld [vmem:[%s6 + $0x20] sm:$0xf]
    %v856 = vld [vmem:[%s6 + $0x24] sm:$0xf]
    %v857 = vld [vmem:[%s6 + $0x28] sm:$0xf]
    %v858 = vld [vmem:[%s6 + $0x2c] sm:$0xf]
    %v859 = vld [vmem:[%s6 + $0x30] sm:$0xf]
    %v860 = vld [vmem:[%s6 + $0x34] sm:$0xf]
    %v861 = vld [vmem:[%s6 + $0x38] sm:$0xf]
    %v862 = vld [vmem:[%s6 + $0x3c] sm:$0xf]
    %v863 = vld [vmem:[%s7] sm:$0x1]
    %v865 = vperm.slane %v863, 0
    %v883 = vunpack.c.l.b16 %v847
    %v884 = vunpack.c.l.b16 %v848
    %v885 = vunpack.c.l.b16 %v849
    %v886 = vunpack.c.l.b16 %v850
    %v887 = vunpack.c.l.b16 %v851
    %v888 = vunpack.c.l.b16 %v852
    %v889 = vunpack.c.l.b16 %v853
    %v890 = vunpack.c.l.b16 %v854
    %v891 = vunpack.c.l.b16 %v855
    %v892 = vunpack.c.l.b16 %v856
    %v893 = vunpack.c.l.b16 %v857
    %v894 = vunpack.c.l.b16 %v858
    %v895 = vunpack.c.l.b16 %v859
    %v896 = vunpack.c.l.b16 %v860
    %v897 = vunpack.c.l.b16 %v861
    %v898 = vunpack.c.l.b16 %v862
    %v899 = vpack.c.b16 %v884, %v883
    %v900 = vpack.c.b16 %v886, %v885
    %v901 = vpack.c.b16 %v888, %v887
    %v902 = vpack.c.b16 %v890, %v889
    %v903 = vpack.c.b16 %v892, %v891
    %v904 = vpack.c.b16 %v894, %v893
    %v905 = vpack.c.b16 %v896, %v895
    %v906 = vpack.c.b16 %v898, %v897
    %915 = vmatpush.bf16.msra.mxu0 %v906
    %916 = vmatpush.bf16.msra.mxu0 %v905
    %917 = vmatpush.bf16.msra.mxu0 %v904
    %918 = vmatpush.bf16.msra.mxu0 %v903
    %919 = vmatpush.bf16.msra.mxu0 %v902
    %920 = vmatpush.bf16.msra.mxu0 %v901
    %921 = vmatpush.bf16.msra.mxu0 %v900
    %922 = vmatpush.bf16.msra.mxu0 %v899
    %923 = vmatmul.bf16.gmra.mxu0 %v846
    %v924 = vpop.f32.mrf.mxu0
    %v925 = vadd.f32 %v865, %v924
    %v926 = vpop.f32.mrf.mxu0
    %927 = vdwg.mxu0
    %v928 = vmax.f32 %v925, 0.0
    %v929 = vpack.c.bf16 %v928, %v928
    %v930 = vld [vmem:[#allocation5] sm:$0xff]
    %v931 = vld [vmem:[#allocation5 + $0x8] sm:$0xff]
    %v932 = vld [vmem:[#allocation5 + $0x10] sm:$0xff]
    %v933 = vld [vmem:[#allocation5 + $0x18] sm:$0xff]
    %v934 = vld [vmem:[#allocation5 + $0x20] sm:$0xff]
    %v935 = vld [vmem:[#allocation5 + $0x28] sm:$0xff]
    %v936 = vld [vmem:[#allocation5 + $0x30] sm:$0xff]
    %v937 = vld [vmem:[#allocation5 + $0x38] sm:$0xff]
    %v938 = vld [vmem:[#allocation5 + $0x40] sm:$0xff]
    %v939 = vld [vmem:[#allocation5 + $0x48] sm:$0xff]
    %v940 = vld [vmem:[#allocation5 + $0x50] sm:$0xff]
    %v941 = vld [vmem:[#allocation5 + $0x58] sm:$0xff]
    %v942 = vld [vmem:[#allocation5 + $0x60] sm:$0xff]
    %v943 = vld [vmem:[#allocation5 + $0x68] sm:$0xff]
    %v944 = vld [vmem:[#allocation5 + $0x70] sm:$0xff]
    %v945 = vld [vmem:[#allocation5 + $0x78] sm:$0xff]
    %v946 = vld [vmem:[#allocation5 + $0x80] sm:$0xff]
    %v947 = vld [vmem:[#allocation5 + $0x88] sm:$0xff]
    %v948 = vld [vmem:[#allocation5 + $0x90] sm:$0xff]
    %v949 = vld [vmem:[#allocation5 + $0x98] sm:$0xff]
    %v950 = vld [vmem:[#allocation5 + $0xa0] sm:$0xff]
    %v951 = vld [vmem:[#allocation5 + $0xa8] sm:$0xff]
    %v952 = vld [vmem:[#allocation5 + $0xb0] sm:$0xff]
    %v953 = vld [vmem:[#allocation5 + $0xb8] sm:$0xff]
    %v954 = vld [vmem:[#allocation5 + $0xc0] sm:$0xff]
    %v955 = vld [vmem:[#allocation5 + $0xc8] sm:$0xff]
    %v956 = vld [vmem:[#allocation5 + $0xd0] sm:$0xff]
    %v957 = vld [vmem:[#allocation5 + $0xd8] sm:$0xff]
    %v958 = vld [vmem:[#allocation5 + $0xe0] sm:$0xff]
    %v959 = vld [vmem:[#allocation5 + $0xe8] sm:$0xff]
    %v960 = vld [vmem:[#allocation5 + $0xf0] sm:$0xff]
    %v961 = vld [vmem:[#allocation5 + $0xf8] sm:$0xff]
    %v962 = vld [vmem:[#allocation5 + $0x100] sm:$0xff]
    %v963 = vld [vmem:[#allocation5 + $0x108] sm:$0xff]
    %v964 = vld [vmem:[#allocation5 + $0x110] sm:$0xff]
    %v965 = vld [vmem:[#allocation5 + $0x118] sm:$0xff]
    %v966 = vld [vmem:[#allocation5 + $0x120] sm:$0xff]
    %v967 = vld [vmem:[#allocation5 + $0x128] sm:$0xff]
    %v968 = vld [vmem:[#allocation5 + $0x130] sm:$0xff]
    %v969 = vld [vmem:[#allocation5 + $0x138] sm:$0xff]
    %v970 = vld [vmem:[#allocation5 + $0x140] sm:$0xff]
    %v971 = vld [vmem:[#allocation5 + $0x148] sm:$0xff]
    %v972 = vld [vmem:[#allocation5 + $0x150] sm:$0xff]
    %v973 = vld [vmem:[#allocation5 + $0x158] sm:$0xff]
    %v974 = vld [vmem:[#allocation5 + $0x160] sm:$0xff]
    %v975 = vld [vmem:[#allocation5 + $0x168] sm:$0xff]
    %v976 = vld [vmem:[#allocation5 + $0x170] sm:$0xff]
    %v977 = vld [vmem:[#allocation5 + $0x178] sm:$0xff]
    %v978 = vld [vmem:[#allocation5 + $0x180] sm:$0xff]
    %v979 = vld [vmem:[#allocation5 + $0x188] sm:$0xff]
    %v980 = vld [vmem:[#allocation5 + $0x190] sm:$0xff]
    %v981 = vld [vmem:[#allocation5 + $0x198] sm:$0xff]
    %v982 = vld [vmem:[#allocation5 + $0x1a0] sm:$0xff]
    %v983 = vld [vmem:[#allocation5 + $0x1a8] sm:$0xff]
    %v984 = vld [vmem:[#allocation5 + $0x1b0] sm:$0xff]
    %v985 = vld [vmem:[#allocation5 + $0x1b8] sm:$0xff]
    %v986 = vld [vmem:[#allocation5 + $0x1c0] sm:$0xff]
    %v987 = vld [vmem:[#allocation5 + $0x1c8] sm:$0xff]
    %v988 = vld [vmem:[#allocation5 + $0x1d0] sm:$0xff]
    %v989 = vld [vmem:[#allocation5 + $0x1d8] sm:$0xff]
    %v990 = vld [vmem:[#allocation5 + $0x1e0] sm:$0xff]
    %v991 = vld [vmem:[#allocation5 + $0x1e8] sm:$0xff]
    %v992 = vld [vmem:[#allocation5 + $0x1f0] sm:$0xff]
    %v993 = vld [vmem:[#allocation5 + $0x1f8] sm:$0xff]
    %v994 = vld [vmem:[%s9] sm:$0xff]
    %v996 = vperm.slane %v994, 0
    %v997 = vperm.slane %v994, 1
    %v998 = vperm.slane %v994, 2
    %v999 = vperm.slane %v994, 3
    %v1000 = vperm.slane %v994, 4
    %v1001 = vperm.slane %v994, 5
    %v1002 = vperm.slane %v994, 6
    %v1003 = vperm.slane %v994, 7
    %v1076 = vunpack.c.l.b16 %v930
    %v1077 = vunpack.c.h.b16 %v930
    %v1078 = vunpack.c.l.b16 %v931
    %v1079 = vunpack.c.h.b16 %v931
    %v1080 = vunpack.c.l.b16 %v932
    %v1081 = vunpack.c.h.b16 %v932
    %v1082 = vunpack.c.l.b16 %v933
    %v1083 = vunpack.c.h.b16 %v933
    %v1084 = vunpack.c.l.b16 %v934
    %v1085 = vunpack.c.h.b16 %v934
    %v1086 = vunpack.c.l.b16 %v935
    %v1087 = vunpack.c.h.b16 %v935
    %v1088 = vunpack.c.l.b16 %v936
    %v1089 = vunpack.c.h.b16 %v936
    %v1090 = vunpack.c.l.b16 %v937
    %v1091 = vunpack.c.h.b16 %v937
    %v1092 = vunpack.c.l.b16 %v938
    %v1093 = vunpack.c.h.b16 %v938
    %v1094 = vunpack.c.l.b16 %v939
    %v1095 = vunpack.c.h.b16 %v939
    %v1096 = vunpack.c.l.b16 %v940
    %v1097 = vunpack.c.h.b16 %v940
    %v1098 = vunpack.c.l.b16 %v941
    %v1099 = vunpack.c.h.b16 %v941
    %v1100 = vunpack.c.l.b16 %v942
    %v1101 = vunpack.c.h.b16 %v942
    %v1102 = vunpack.c.l.b16 %v943
    %v1103 = vunpack.c.h.b16 %v943
    %v1104 = vunpack.c.l.b16 %v944
    %v1105 = vunpack.c.h.b16 %v944
    %v1106 = vunpack.c.l.b16 %v945
    %v1107 = vunpack.c.h.b16 %v945
    %v1108 = vunpack.c.l.b16 %v946
    %v1109 = vunpack.c.h.b16 %v946
    %v1110 = vunpack.c.l.b16 %v947
    %v1111 = vunpack.c.h.b16 %v947
    %v1112 = vunpack.c.l.b16 %v948
    %v1113 = vunpack.c.h.b16 %v948
    %v1114 = vunpack.c.l.b16 %v949
    %v1115 = vunpack.c.h.b16 %v949
    %v1116 = vunpack.c.l.b16 %v950
    %v1117 = vunpack.c.h.b16 %v950
    %v1118 = vunpack.c.l.b16 %v951
    %v1119 = vunpack.c.h.b16 %v951
    %v1120 = vunpack.c.l.b16 %v952
    %v1121 = vunpack.c.h.b16 %v952
    %v1122 = vunpack.c.l.b16 %v953
    %v1123 = vunpack.c.h.b16 %v953
    %v1124 = vunpack.c.l.b16 %v954
    %v1125 = vunpack.c.h.b16 %v954
    %v1126 = vunpack.c.l.b16 %v955
    %v1127 = vunpack.c.h.b16 %v955
    %v1128 = vunpack.c.l.b16 %v956
    %v1129 = vunpack.c.h.b16 %v956
    %v1130 = vunpack.c.l.b16 %v957
    %v1131 = vunpack.c.h.b16 %v957
    %v1132 = vunpack.c.l.b16 %v958
    %v1133 = vunpack.c.h.b16 %v958
    %v1134 = vunpack.c.l.b16 %v959
    %v1135 = vunpack.c.h.b16 %v959
    %v1136 = vunpack.c.l.b16 %v960
    %v1137 = vunpack.c.h.b16 %v960
    %v1138 = vunpack.c.l.b16 %v961
    %v1139 = vunpack.c.h.b16 %v961
    %v1140 = vunpack.c.l.b16 %v962
    %v1141 = vunpack.c.h.b16 %v962
    %v1142 = vunpack.c.l.b16 %v963
    %v1143 = vunpack.c.h.b16 %v963
    %v1144 = vunpack.c.l.b16 %v964
    %v1145 = vunpack.c.h.b16 %v964
    %v1146 = vunpack.c.l.b16 %v965
    %v1147 = vunpack.c.h.b16 %v965
    %v1148 = vunpack.c.l.b16 %v966
    %v1149 = vunpack.c.h.b16 %v966
    %v1150 = vunpack.c.l.b16 %v967
    %v1151 = vunpack.c.h.b16 %v967
    %v1152 = vunpack.c.l.b16 %v968
    %v1153 = vunpack.c.h.b16 %v968
    %v1154 = vunpack.c.l.b16 %v969
    %v1155 = vunpack.c.h.b16 %v969
    %v1156 = vunpack.c.l.b16 %v970
    %v1157 = vunpack.c.h.b16 %v970
    %v1158 = vunpack.c.l.b16 %v971
    %v1159 = vunpack.c.h.b16 %v971
    %v1160 = vunpack.c.l.b16 %v972
    %v1161 = vunpack.c.h.b16 %v972
    %v1162 = vunpack.c.l.b16 %v973
    %v1163 = vunpack.c.h.b16 %v973
    %v1164 = vunpack.c.l.b16 %v974
    %v1165 = vunpack.c.h.b16 %v974
    %v1166 = vunpack.c.l.b16 %v975
    %v1167 = vunpack.c.h.b16 %v975
    %v1168 = vunpack.c.l.b16 %v976
    %v1169 = vunpack.c.h.b16 %v976
    %v1170 = vunpack.c.l.b16 %v977
    %v1171 = vunpack.c.h.b16 %v977
    %v1172 = vunpack.c.l.b16 %v978
    %v1173 = vunpack.c.h.b16 %v978
    %v1174 = vunpack.c.l.b16 %v979
    %v1175 = vunpack.c.h.b16 %v979
    %v1176 = vunpack.c.l.b16 %v980
    %v1177 = vunpack.c.h.b16 %v980
    %v1178 = vunpack.c.l.b16 %v981
    %v1179 = vunpack.c.h.b16 %v981
    %v1180 = vunpack.c.l.b16 %v982
    %v1181 = vunpack.c.h.b16 %v982
    %v1182 = vunpack.c.l.b16 %v983
    %v1183 = vunpack.c.h.b16 %v983
    %v1184 = vunpack.c.l.b16 %v984
    %v1185 = vunpack.c.h.b16 %v984
    %v1186 = vunpack.c.l.b16 %v985
    %v1187 = vunpack.c.h.b16 %v985
    %v1188 = vunpack.c.l.b16 %v986
    %v1189 = vunpack.c.h.b16 %v986
    %v1190 = vunpack.c.l.b16 %v987
    %v1191 = vunpack.c.h.b16 %v987
    %v1192 = vunpack.c.l.b16 %v988
    %v1193 = vunpack.c.h.b16 %v988
    %v1194 = vunpack.c.l.b16 %v989
    %v1195 = vunpack.c.h.b16 %v989
    %v1196 = vunpack.c.l.b16 %v990
    %v1197 = vunpack.c.h.b16 %v990
    %v1198 = vunpack.c.l.b16 %v991
    %v1199 = vunpack.c.h.b16 %v991
    %v1200 = vunpack.c.l.b16 %v992
    %v1201 = vunpack.c.h.b16 %v992
    %v1202 = vunpack.c.l.b16 %v993
    %v1203 = vunpack.c.h.b16 %v993
    %v1204 = vpack.c.b16 %v1084, %v1076
    %v1205 = vpack.c.b16 %v1085, %v1077
    %v1206 = vpack.c.b16 %v1086, %v1078
    %v1207 = vpack.c.b16 %v1087, %v1079
    %v1208 = vpack.c.b16 %v1088, %v1080
    %v1209 = vpack.c.b16 %v1089, %v1081
    %v1210 = vpack.c.b16 %v1090, %v1082
    %v1211 = vpack.c.b16 %v1091, %v1083
    %v1212 = vpack.c.b16 %v1100, %v1092
    %v1213 = vpack.c.b16 %v1101, %v1093
    %v1214 = vpack.c.b16 %v1102, %v1094
    %v1215 = vpack.c.b16 %v1103, %v1095
    %v1216 = vpack.c.b16 %v1104, %v1096
    %v1217 = vpack.c.b16 %v1105, %v1097
    %v1218 = vpack.c.b16 %v1106, %v1098
    %v1219 = vpack.c.b16 %v1107, %v1099
    %v1220 = vpack.c.b16 %v1116, %v1108
    %v1221 = vpack.c.b16 %v1117, %v1109
    %v1222 = vpack.c.b16 %v1118, %v1110
    %v1223 = vpack.c.b16 %v1119, %v1111
    %v1224 = vpack.c.b16 %v1120, %v1112
    %v1225 = vpack.c.b16 %v1121, %v1113
    %v1226 = vpack.c.b16 %v1122, %v1114
    %v1227 = vpack.c.b16 %v1123, %v1115
    %v1228 = vpack.c.b16 %v1132, %v1124
    %v1229 = vpack.c.b16 %v1133, %v1125
    %v1230 = vpack.c.b16 %v1134, %v1126
    %v1231 = vpack.c.b16 %v1135, %v1127
    %v1232 = vpack.c.b16 %v1136, %v1128
    %v1233 = vpack.c.b16 %v1137, %v1129
    %v1234 = vpack.c.b16 %v1138, %v1130
    %v1235 = vpack.c.b16 %v1139, %v1131
    %v1236 = vpack.c.b16 %v1148, %v1140
    %v1237 = vpack.c.b16 %v1149, %v1141
    %v1238 = vpack.c.b16 %v1150, %v1142
    %v1239 = vpack.c.b16 %v1151, %v1143
    %v1240 = vpack.c.b16 %v1152, %v1144
    %v1241 = vpack.c.b16 %v1153, %v1145
    %v1242 = vpack.c.b16 %v1154, %v1146
    %v1243 = vpack.c.b16 %v1155, %v1147
    %v1244 = vpack.c.b16 %v1164, %v1156
    %v1245 = vpack.c.b16 %v1165, %v1157
    %v1246 = vpack.c.b16 %v1166, %v1158
    %v1247 = vpack.c.b16 %v1167, %v1159
    %v1248 = vpack.c.b16 %v1168, %v1160
    %v1249 = vpack.c.b16 %v1169, %v1161
    %v1250 = vpack.c.b16 %v1170, %v1162
    %v1251 = vpack.c.b16 %v1171, %v1163
    %v1252 = vpack.c.b16 %v1180, %v1172
    %v1253 = vpack.c.b16 %v1181, %v1173
    %v1254 = vpack.c.b16 %v1182, %v1174
    %v1255 = vpack.c.b16 %v1183, %v1175
    %v1256 = vpack.c.b16 %v1184, %v1176
    %v1257 = vpack.c.b16 %v1185, %v1177
    %v1258 = vpack.c.b16 %v1186, %v1178
    %v1259 = vpack.c.b16 %v1187, %v1179
    %v1260 = vpack.c.b16 %v1196, %v1188
    %v1261 = vpack.c.b16 %v1197, %v1189
    %v1262 = vpack.c.b16 %v1198, %v1190
    %v1263 = vpack.c.b16 %v1199, %v1191
    %v1264 = vpack.c.b16 %v1200, %v1192
    %v1265 = vpack.c.b16 %v1201, %v1193
    %v1266 = vpack.c.b16 %v1202, %v1194
    %v1267 = vpack.c.b16 %v1203, %v1195
    %1332 = vmatpush.bf16.msra.mxu0 %v1260
    %1333 = vmatpush.bf16.msra.mxu0 %v1252
    %1334 = vmatpush.bf16.msra.mxu0 %v1244
    %1335 = vmatpush.bf16.msra.mxu0 %v1236
    %1336 = vmatpush.bf16.msra.mxu0 %v1228
    %1337 = vmatpush.bf16.msra.mxu0 %v1220
    %1338 = vmatpush.bf16.msra.mxu0 %v1212
    %1339 = vmatpush.bf16.msra.mxu0 %v1204
    %1340 = vmatmul.bf16.gmra.mxu0 %v929
    %v1341 = vpop.f32.mrf.mxu0
    %v1342 = vadd.f32 %v996, %v1341
    %v1343 = vpop.f32.mrf.mxu0
    %1344 = vdwg.mxu0
    %1345 = vmatpush.bf16.msra.mxu0 %v1261
    %1346 = vmatpush.bf16.msra.mxu0 %v1253
    %1347 = vmatpush.bf16.msra.mxu0 %v1245
    %1348 = vmatpush.bf16.msra.mxu0 %v1237
    %1349 = vmatpush.bf16.msra.mxu0 %v1229
    %1350 = vmatpush.bf16.msra.mxu0 %v1221
    %1351 = vmatpush.bf16.msra.mxu0 %v1213
    %1352 = vmatpush.bf16.msra.mxu0 %v1205
    %1353 = vmatmul.bf16.gmra.mxu0 %v929
    %v1354 = vpop.f32.mrf.mxu0
    %v1355 = vadd.f32 %v997, %v1354
    %v1356 = vpop.f32.mrf.mxu0
    %1357 = vdwg.mxu0
    %1358 = vmatpush.bf16.msra.mxu0 %v1262
    %1359 = vmatpush.bf16.msra.mxu0 %v1254
    %1360 = vmatpush.bf16.msra.mxu0 %v1246
    %1361 = vmatpush.bf16.msra.mxu0 %v1238
    %1362 = vmatpush.bf16.msra.mxu0 %v1230
    %1363 = vmatpush.bf16.msra.mxu0 %v1222
    %1364 = vmatpush.bf16.msra.mxu0 %v1214
    %1365 = vmatpush.bf16.msra.mxu0 %v1206
    %1366 = vmatmul.bf16.gmra.mxu0 %v929
    %v1367 = vpop.f32.mrf.mxu0
    %v1368 = vadd.f32 %v998, %v1367
    %v1369 = vpop.f32.mrf.mxu0
    %1370 = vdwg.mxu0
    %1371 = vmatpush.bf16.msra.mxu0 %v1263
    %1372 = vmatpush.bf16.msra.mxu0 %v1255
    %1373 = vmatpush.bf16.msra.mxu0 %v1247
    %1374 = vmatpush.bf16.msra.mxu0 %v1239
    %1375 = vmatpush.bf16.msra.mxu0 %v1231
    %1376 = vmatpush.bf16.msra.mxu0 %v1223
    %1377 = vmatpush.bf16.msra.mxu0 %v1215
    %1378 = vmatpush.bf16.msra.mxu0 %v1207
    %1379 = vmatmul.bf16.gmra.mxu0 %v929
    %v1380 = vpop.f32.mrf.mxu0
    %v1381 = vadd.f32 %v999, %v1380
    %v1382 = vpop.f32.mrf.mxu0
    %1383 = vdwg.mxu0
    %1384 = vmatpush.bf16.msra.mxu0 %v1264
    %1385 = vmatpush.bf16.msra.mxu0 %v1256
    %1386 = vmatpush.bf16.msra.mxu0 %v1248
    %1387 = vmatpush.bf16.msra.mxu0 %v1240
    %1388 = vmatpush.bf16.msra.mxu0 %v1232
    %1389 = vmatpush.bf16.msra.mxu0 %v1224
    %1390 = vmatpush.bf16.msra.mxu0 %v1216
    %1391 = vmatpush.bf16.msra.mxu0 %v1208
    %1392 = vmatmul.bf16.gmra.mxu0 %v929
    %v1393 = vpop.f32.mrf.mxu0
    %v1394 = vadd.f32 %v1000, %v1393
    %v1395 = vpop.f32.mrf.mxu0
    %1396 = vdwg.mxu0
    %1397 = vmatpush.bf16.msra.mxu0 %v1265
    %1398 = vmatpush.bf16.msra.mxu0 %v1257
    %1399 = vmatpush.bf16.msra.mxu0 %v1249
    %1400 = vmatpush.bf16.msra.mxu0 %v1241
    %1401 = vmatpush.bf16.msra.mxu0 %v1233
    %1402 = vmatpush.bf16.msra.mxu0 %v1225
    %1403 = vmatpush.bf16.msra.mxu0 %v1217
    %1404 = vmatpush.bf16.msra.mxu0 %v1209
    %1405 = vmatmul.bf16.gmra.mxu0 %v929
    %v1406 = vpop.f32.mrf.mxu0
    %v1407 = vadd.f32 %v1001, %v1406
    %v1408 = vpop.f32.mrf.mxu0
    %1409 = vdwg.mxu0
    %1410 = vmatpush.bf16.msra.mxu0 %v1266
    %1411 = vmatpush.bf16.msra.mxu0 %v1258
    %1412 = vmatpush.bf16.msra.mxu0 %v1250
    %1413 = vmatpush.bf16.msra.mxu0 %v1242
    %1414 = vmatpush.bf16.msra.mxu0 %v1234
    %1415 = vmatpush.bf16.msra.mxu0 %v1226
    %1416 = vmatpush.bf16.msra.mxu0 %v1218
    %1417 = vmatpush.bf16.msra.mxu0 %v1210
    %1418 = vmatmul.bf16.gmra.mxu0 %v929
    %v1419 = vpop.f32.mrf.mxu0
    %v1420 = vadd.f32 %v1002, %v1419
    %v1421 = vpop.f32.mrf.mxu0
    %1422 = vdwg.mxu0
    %1423 = vmatpush.bf16.msra.mxu0 %v1267
    %1424 = vmatpush.bf16.msra.mxu0 %v1259
    %1425 = vmatpush.bf16.msra.mxu0 %v1251
    %1426 = vmatpush.bf16.msra.mxu0 %v1243
    %1427 = vmatpush.bf16.msra.mxu0 %v1235
    %1428 = vmatpush.bf16.msra.mxu0 %v1227
    %1429 = vmatpush.bf16.msra.mxu0 %v1219
    %1430 = vmatpush.bf16.msra.mxu0 %v1211
    %1431 = vmatmul.bf16.gmra.mxu0 %v929
    %v1432 = vpop.f32.mrf.mxu0
    %v1433 = vadd.f32 %v1003, %v1432
    %v1434 = vpop.f32.mrf.mxu0
    %1435 = vdwg.mxu0
    %v1436 = vxor.u32 %v1342, 2147483648
    %v1437 = vxor.u32 %v1355, 2147483648
    %v1438 = vxor.u32 %v1368, 2147483648
    %v1439 = vxor.u32 %v1381, 2147483648
    %v1440 = vxor.u32 %v1394, 2147483648
    %v1441 = vxor.u32 %v1407, 2147483648
    %v1442 = vxor.u32 %v1420, 2147483648
    %v1443 = vxor.u32 %v1433, 2147483648
    %v1444 = vmul.f32 %v1436, 1.442695
    %v1445 = vpow.pop %v1444
    %v1446 = vmul.f32 %v1437, 1.442695
    %v1447 = vpow.pop %v1446
    %v1448 = vmul.f32 %v1438, 1.442695
    %v1449 = vpow.pop %v1448
    %v1450 = vmul.f32 %v1439, 1.442695
    %v1451 = vpow.pop %v1450
    %v1452 = vmul.f32 %v1440, 1.442695
    %v1453 = vpow.pop %v1452
    %v1454 = vmul.f32 %v1441, 1.442695
    %v1455 = vpow.pop %v1454
    %v1456 = vmul.f32 %v1442, 1.442695
    %v1457 = vpow.pop %v1456
    %v1458 = vmul.f32 %v1443, 1.442695
    %v1459 = vpow.pop %v1458
    %v1460 = vadd.f32 %v1445, 1.0
    %v1461 = vadd.f32 %v1447, 1.0
    %v1462 = vadd.f32 %v1449, 1.0
    %v1463 = vadd.f32 %v1451, 1.0
    %v1464 = vadd.f32 %v1453, 1.0
    %v1465 = vadd.f32 %v1455, 1.0
    %v1466 = vadd.f32 %v1457, 1.0
    %v1467 = vadd.f32 %v1459, 1.0
    %v1468 = vrcp.pop %v1460
    %v1469 = vmul.f32 %v1460, %v1468
    %v1470 = vsub.f32 1.0, %v1469
    %v1471 = vmul.f32 %v1468, %v1470
    %v1472 = vadd.f32 %v1468, %v1471
    %vm1473 = vweird.f32 %v1460
    %vm1474 = vweird.f32 %v1468
    %vm1475 = vmor %vm1473, %vm1474
    %v1476 = vsel %vm1475, %v1468, %v1472
    %v1477 = vand.u32 2147483647, %v1460
    %vm1478 = vcmp.eq.f32.partialorder %v1477, 8.507059e+37
    %v1479 = vand.u32 %v1460, 2147483648
    %v1480 = vor.u32 1.1754944e-38, %v1479
    %v1481 = vsel %vm1478, %v1480, %v1476
    %v1482 = vmul.f32 1.0, %v1481
    %v1483 = vrcp.pop %v1461
    %v1484 = vmul.f32 %v1461, %v1483
    %v1485 = vsub.f32 1.0, %v1484
    %v1486 = vmul.f32 %v1483, %v1485
    %v1487 = vadd.f32 %v1483, %v1486
    %vm1488 = vweird.f32 %v1461
    %vm1489 = vweird.f32 %v1483
    %vm1490 = vmor %vm1488, %vm1489
    %v1491 = vsel %vm1490, %v1483, %v1487
    %v1492 = vand.u32 2147483647, %v1461
    %vm1493 = vcmp.eq.f32.partialorder %v1492, 8.507059e+37
    %v1494 = vand.u32 %v1461, 2147483648
    %v1495 = vor.u32 1.1754944e-38, %v1494
    %v1496 = vsel %vm1493, %v1495, %v1491
    %v1497 = vmul.f32 1.0, %v1496
    %v1498 = vrcp.pop %v1462
    %v1499 = vmul.f32 %v1462, %v1498
    %v1500 = vsub.f32 1.0, %v1499
    %v1501 = vmul.f32 %v1498, %v1500
    %v1502 = vadd.f32 %v1498, %v1501
    %vm1503 = vweird.f32 %v1462
    %vm1504 = vweird.f32 %v1498
    %vm1505 = vmor %vm1503, %vm1504
    %v1506 = vsel %vm1505, %v1498, %v1502
    %v1507 = vand.u32 2147483647, %v1462
    %vm1508 = vcmp.eq.f32.partialorder %v1507, 8.507059e+37
    %v1509 = vand.u32 %v1462, 2147483648
    %v1510 = vor.u32 1.1754944e-38, %v1509
    %v1511 = vsel %vm1508, %v1510, %v1506
    %v1512 = vmul.f32 1.0, %v1511
    %v1513 = vrcp.pop %v1463
    %v1514 = vmul.f32 %v1463, %v1513
    %v1515 = vsub.f32 1.0, %v1514
    %v1516 = vmul.f32 %v1513, %v1515
    %v1517 = vadd.f32 %v1513, %v1516
    %vm1518 = vweird.f32 %v1463
    %vm1519 = vweird.f32 %v1513
    %vm1520 = vmor %vm1518, %vm1519
    %v1521 = vsel %vm1520, %v1513, %v1517
    %v1522 = vand.u32 2147483647, %v1463
    %vm1523 = vcmp.eq.f32.partialorder %v1522, 8.507059e+37
    %v1524 = vand.u32 %v1463, 2147483648
    %v1525 = vor.u32 1.1754944e-38, %v1524
    %v1526 = vsel %vm1523, %v1525, %v1521
    %v1527 = vmul.f32 1.0, %v1526
    %v1528 = vrcp.pop %v1464
    %v1529 = vmul.f32 %v1464, %v1528
    %v1530 = vsub.f32 1.0, %v1529
    %v1531 = vmul.f32 %v1528, %v1530
    %v1532 = vadd.f32 %v1528, %v1531
    %vm1533 = vweird.f32 %v1464
    %vm1534 = vweird.f32 %v1528
    %vm1535 = vmor %vm1533, %vm1534
    %v1536 = vsel %vm1535, %v1528, %v1532
    %v1537 = vand.u32 2147483647, %v1464
    %vm1538 = vcmp.eq.f32.partialorder %v1537, 8.507059e+37
    %v1539 = vand.u32 %v1464, 2147483648
    %v1540 = vor.u32 1.1754944e-38, %v1539
    %v1541 = vsel %vm1538, %v1540, %v1536
    %v1542 = vmul.f32 1.0, %v1541
    %v1543 = vrcp.pop %v1465
    %v1544 = vmul.f32 %v1465, %v1543
    %v1545 = vsub.f32 1.0, %v1544
    %v1546 = vmul.f32 %v1543, %v1545
    %v1547 = vadd.f32 %v1543, %v1546
    %vm1548 = vweird.f32 %v1465
    %vm1549 = vweird.f32 %v1543
    %vm1550 = vmor %vm1548, %vm1549
    %v1551 = vsel %vm1550, %v1543, %v1547
    %v1552 = vand.u32 2147483647, %v1465
    %vm1553 = vcmp.eq.f32.partialorder %v1552, 8.507059e+37
    %v1554 = vand.u32 %v1465, 2147483648
    %v1555 = vor.u32 1.1754944e-38, %v1554
    %v1556 = vsel %vm1553, %v1555, %v1551
    %v1557 = vmul.f32 1.0, %v1556
    %v1558 = vrcp.pop %v1466
    %v1559 = vmul.f32 %v1466, %v1558
    %v1560 = vsub.f32 1.0, %v1559
    %v1561 = vmul.f32 %v1558, %v1560
    %v1562 = vadd.f32 %v1558, %v1561
    %vm1563 = vweird.f32 %v1466
    %vm1564 = vweird.f32 %v1558
    %vm1565 = vmor %vm1563, %vm1564
    %v1566 = vsel %vm1565, %v1558, %v1562
    %v1567 = vand.u32 2147483647, %v1466
    %vm1568 = vcmp.eq.f32.partialorder %v1567, 8.507059e+37
    %v1569 = vand.u32 %v1466, 2147483648
    %v1570 = vor.u32 1.1754944e-38, %v1569
    %v1571 = vsel %vm1568, %v1570, %v1566
    %v1572 = vmul.f32 1.0, %v1571
    %v1573 = vrcp.pop %v1467
    %v1574 = vmul.f32 %v1467, %v1573
    %v1575 = vsub.f32 1.0, %v1574
    %v1576 = vmul.f32 %v1573, %v1575
    %v1577 = vadd.f32 %v1573, %v1576
    %vm1578 = vweird.f32 %v1467
    %vm1579 = vweird.f32 %v1573
    %vm1580 = vmor %vm1578, %vm1579
    %v1581 = vsel %vm1580, %v1573, %v1577
    %v1582 = vand.u32 2147483647, %v1467
    %vm1583 = vcmp.eq.f32.partialorder %v1582, 8.507059e+37
    %v1584 = vand.u32 %v1467, 2147483648
    %v1585 = vor.u32 1.1754944e-38, %v1584
    %v1586 = vsel %vm1583, %v1585, %v1581
    %v1587 = vmul.f32 1.0, %v1586
    %v1596 = vrot.slane %v1497, 6
    %v1597 = vrot.slane %v1512, 4
    %v1598 = vrot.slane %v1527, 2
    %v1599 = vrot.slane %v1557, 6
    %v1600 = vrot.slane %v1572, 4
    %v1601 = vrot.slane %v1587, 2
    %vm1602 = vcmask 1041408
    %v1603 = vsel %vm1602, %v1482, %v1596
    %vm1604 = vcmask 1045508
    %v1605 = vsel %vm1604, %v1597, %v1598
    %vm1606 = vcmask 1043456
    %v1607 = vsel %vm1606, %v1603, %v1605
    %v1608 = vsel %vm1602, %v1542, %v1599
    %v1609 = vsel %vm1604, %v1600, %v1601
    %v1610 = vsel %vm1606, %v1608, %v1609
    %1613 = vst [vmem:[#allocation7] sm:$0xff] %v1607
    %1614 = vst [vmem:[#allocation7 + $0x8] sm:$0xff] %v1610
    // Predicated region
    $region50: #{vae_forward.1} parent=1 // pred_check
      _
    $region51: #{vae_forward.1} parent=1 // pred_check_branch
      %1616 = sbr.rel (0) target = $region53
    $region52: #{vae_forward.1} parent=1 // pred_region
      %1618 = vsyncadd [#allocation4], 0
      %s1620 = sshll.u32 [#allocation7], 4
      %s1621 = int_to_ptr.vmem [resolvable:$true] %s1620
      %s1622 = sshll.u32 %s10, 4
      %s1623 = int_to_ptr.hbm [resolvable:$true] %s1622
      %1625 = dma.vmem_to_hbm [thread:$0]  %s1621, 256, %s1623, [#allocation4]
    $region53: #{vae_forward.1} parent=1 // pred_fallthru
      _
    // Predicated region
    $region54: #{vae_forward.1} parent=1 // pred_check
      _
    $region55: #{vae_forward.1} parent=1 // pred_check_branch
      %1627 = sbr.rel (0) target = $region57
    $region56: #{vae_forward.1} parent=1 // pred_region
      _
    $region57: #{vae_forward.1} parent=1 // pred_fallthru
      _
    // Predicated region
    $region58: #{vae_forward.1} parent=1 // pred_check
      _
    $region59: #{vae_forward.1} parent=1 // pred_check_branch
      %1629 = sbr.rel (0) target = $region61
    $region60: #{vae_forward.1} parent=1 // pred_region
      %1631 = dma.done [#allocation4], 256
    $region61: #{vae_forward.1} parent=1 // pred_fallthru
      _
    // Predicated region
    $region62: #{vae_forward.1} parent=1 // pred_check
      _
    $region63: #{vae_forward.1} parent=1 // pred_check_branch
      %1633 = sbr.rel (0) target = $region65
    $region64: #{vae_forward.1} parent=1 // pred_region
      _
    $region65: #{vae_forward.1} parent=1 // pred_fallthru
      _
    %1634 = vsyncpa [#allocation3], 1
    %1635 = vsyncpa [#allocation6], 1
    %1636 = vsyncpa [#allocation4], 1

</llo_original>
